<compile_context>
chip_gen: v7x
topology: tpu7x:2x2x1
jax: 0.10.0
libtpu: 0.0.40
codegen_flags: <defaults>
</compile_context>

<pallas_src>
import functools

import jax
import jax.numpy as jnp
from jax.experimental import pallas as pl
from jax.experimental.pallas import tpu as pltpu


# --------------------------------------------------------------------------------------
# Shared math helpers (pure jnp -> usable both inside the kernel and in the reference)
# --------------------------------------------------------------------------------------
def _layernorm(x, w, b, eps=1e-5):
    # Single-pass LayerNorm: var = E[x^2] - E[x]^2 halves the cross-lane reductions.
    mu = jnp.mean(x, axis=-1, keepdims=True)
    ms = jnp.mean(x * x, axis=-1, keepdims=True)
    return (x - mu) * jax.lax.rsqrt(ms - mu * mu + eps) * w + b


def _slab_layout(H, E, P, D, F):
    """Static column offsets of each logical parameter inside the packed weight slabs."""
    HE, HP = H * E, H * P

    def build(entries):
        off, out = 0, {}
        for name, size in entries:
            out[name] = (off, size)
            off += size
        return out, off

    wd, wd_cols = build([("cq", HE), ("ckv", HE + HP), ("sqkv", 2 * HE + HP), ("w1", F)])
    wo, wo_cols = build([("co", D), ("so", D)])
    b, b_cols = build([("cbq", HE), ("cbkv", HE + HP), ("cbo", D),
                       ("sbqkv", 2 * HE + HP), ("sbo", D),
                       ("b1", F), ("b2", D),
                       ("ln1w", D), ("ln1b", D), ("ln2w", D), ("ln2b", D)])
    return dict(wd=wd, wd_cols=wd_cols, wo=wo, wo_cols=wo_cols, b=b, b_cols=b_cols)


# --------------------------------------------------------------------------------------
# In-kernel helpers
# --------------------------------------------------------------------------------------
def _mm(a, w):
    # bf16 MXU operands, f32 accumulation.
    return jnp.dot(a.astype(jnp.bfloat16), w.astype(jnp.bfloat16),
                   preferred_element_type=jnp.float32)


def _split_heads(t, n_heads, width):
    # (N, H*width) -> (H, N, width).  Stack-of-lane-slices instead of reshape+transpose:
    # same data movement, but only uses slice/concat ops that lower cleanly in Mosaic.
    return jnp.stack([t[:, h * width:(h + 1) * width] for h in range(n_heads)], axis=0)


def _merge_heads(t):
    # (H, N, width) -> (N, H*width), head-major lanes (matches torch .view(B, L, -1)).
    return jnp.concatenate([t[h] for h in range(t.shape[0])], axis=-1)


def _attention(q, k, v, n_heads, d_keys, d_values):
    """Head-batched softmax attention.  q: (Nq, H*E), k: (Nk, H*E), v: (Nk, H*P).
    The 1/sqrt(d_keys) scale is already folded into the query projection."""
    f32, bf16 = jnp.float32, jnp.bfloat16
    qh = _split_heads(q, n_heads, d_keys).astype(bf16)       # (H, Nq, E)
    kh = _split_heads(k, n_heads, d_keys).astype(bf16)       # (H, Nk, E)
    vh = _split_heads(v, n_heads, d_values).astype(bf16)     # (H, Nk, P)
    s = jnp.einsum("hqe,hke->hqk", qh, kh, preferred_element_type=f32)
    s = s - jnp.max(s, axis=-1, keepdims=True)
    p = jnp.exp(s)
    p = p * pl.reciprocal(jnp.sum(p, axis=-1, keepdims=True), approx=False)  # exact
    ctx = jnp.einsum("hqk,hkp->hqp", p.astype(bf16), vh, preferred_element_type=f32)
    return _merge_heads(ctx)                                  # (Nq, H*P) f32


# --------------------------------------------------------------------------------------
# Fused kernel: one grid step = one (batch element, perceiver block)
# --------------------------------------------------------------------------------------
def perceiver_kernel(x_ref, lat_ref, wd_ref, wo_ref, w2_ref, b_ref, o_ref, y_ref,
                     *, n_heads, d_keys, d_values, lay):
    f32 = jnp.float32
    HE = n_heads * d_keys
    blk = pl.program_id(1)

    @pl.when(blk == 0)
    def _init():
        y_ref[...] = lat_ref[...].astype(f32)

    def w_d(name):
        off, size = lay["wd"][name]
        return wd_ref[0, :, off:off + size]       # (D, size)

    def w_o(name):
        off, size = lay["wo"][name]
        return wo_ref[0, :, off:off + size]       # (H*P, size)

    def bias(name):
        off, size = lay["b"][name]
        return b_ref[0, :, off:off + size]        # (1, size)

    x = x_ref[0].astype(f32)                      # (M, D)
    y = y_ref[...]                                # (N_latent, D) -- carried across blocks

    # ---- cross-attention: latent queries attend to the input array ---------------------
    q = _mm(y, w_d("cq")) + bias("cbq")           # (N, H*E)   (softmax scale pre-folded)
    kv = _mm(x, w_d("ckv")) + bias("cbkv")        # (M, H*E + H*P), one fused K|V matmul
    ctx = _attention(q, kv[:, :HE], kv[:, HE:], n_heads, d_keys, d_values)
    y = _mm(ctx, w_o("co")) + bias("cbo")         # (N, D)

    # ---- latent transformer (post-norm encoder layer) ----------------------------------
    qkv = _mm(y, w_d("sqkv")) + bias("sbqkv")     # (N, 2*H*E + H*P), one fused Q|K|V matmul
    ctx = _attention(qkv[:, :HE], qkv[:, HE:2 * HE], qkv[:, 2 * HE:],
                     n_heads, d_keys, d_values)
    attn = _mm(ctx, w_o("so")) + bias("sbo")
    z = _layernorm(y + attn, bias("ln1w"), bias("ln1b"))
    f = jnp.maximum(_mm(z, w_d("w1")) + bias("b1"), 0.0)
    f = _mm(f, w2_ref[0]) + bias("b2")
    y = _layernorm(z + f, bias("ln2w"), bias("ln2b"))

    y_ref[...] = y                                # carry the latent to the next block

    @pl.when(blk == pl.num_programs(1) - 1)
    def _write():
        # Lane-dense store: flatten (N, D) -> (1, N*D) via row-slice + lane-concat
        # (row-major, identical to reshape, but avoids a sublane->lane relayout in-kernel).
        row = jnp.concatenate([y[r:r + 1, :] for r in range(y.shape[0])], axis=-1)
        o_ref[0] = row.astype(o_ref.dtype)


# --------------------------------------------------------------------------------------
# Wrapper: one pallas_call, grid=(batch, blocks)
# --------------------------------------------------------------------------------------
def perceiver_forward(x, packed):
    B, M, D = x.shape
    lat = packed["latent"]
    n_latent, latent_dims = lat.shape
    n_blocks, H = packed["n_blocks"], packed["n_heads"]
    E, P = packed["d_keys"], packed["d_values"]
    lay = packed["layout"]
    wd, wo, w2, bias = packed["wd"], packed["wo"], packed["w2"], packed["bias"]
    ND = n_latent * latent_dims

    # Whole-M K/V plus (H, N, M) scores live in VMEM; fail loudly before silently blowing
    # the scoped-VMEM budget when scaling shapes up (see TODO on flash-style M tiling).
    per_block_w = 4 * (wd.shape[1] * wd.shape[2] + wo.shape[1] * wo.shape[2]
                       + w2.shape[1] * w2.shape[2] + bias.shape[2])
    vmem_est = 2 * 4 * M * D + 2 * per_block_w + 4 * (ND + H * n_latent * M)
    assert vmem_est < 16 * 1024 * 1024, (
        f"~{vmem_est} B per-step VMEM: add flash-style M tiling before scaling up")

    kernel = functools.partial(perceiver_kernel,
                               n_heads=H, d_keys=E, d_values=P, lay=lay)

    out = pl.pallas_call(
        kernel,
        out_shape=jax.ShapeDtypeStruct((B, 1, ND), x.dtype),
        grid=(B, n_blocks),
        in_specs=[
            pl.BlockSpec((1, M, D), lambda b, i: (b, 0, 0)),                  # x (per batch row)
            pl.BlockSpec((n_latent, latent_dims), lambda b, i: (0, 0)),       # initial latent
            pl.BlockSpec((1, D, lay["wd_cols"]), lambda b, i: (i, 0, 0)),     # (D, .) matmul slab
            pl.BlockSpec((1, H * P, lay["wo_cols"]), lambda b, i: (i, 0, 0)), # output projections
            pl.BlockSpec((1, w2.shape[1], w2.shape[2]), lambda b, i: (i, 0, 0)),  # FFN w2
            pl.BlockSpec((1, 1, lay["b_cols"]), lambda b, i: (i, 0, 0)),      # biases + LN params
        ],
        out_specs=pl.BlockSpec((1, 1, ND), lambda b, i: (b, 0, 0)),
        scratch_shapes=[pltpu.VMEM((n_latent, latent_dims), jnp.float32)],
        compiler_params=pltpu.CompilerParams(
            dimension_semantics=("parallel", "arbitrary")),
    )(x, lat, wd, wo, w2, bias)
    return out.reshape(B, n_latent, latent_dims)


# --------------------------------------------------------------------------------------
# Parameter construction (deterministic, synthetic).
# Attention weights are stored head-folded, stacked over blocks (== torch Linear weight.T,
# with head h occupying columns [h*E, (h+1)*E), matching .view(B, L, H, E)):
#   wq/wk: (n_blocks, D, H*E), wv: (n_blocks, D, H*P), wo: (n_blocks, H*P, D)
# --------------------------------------------------------------------------------------
def init_attention_params(key, n_blocks, d_model, n_heads, d_keys, d_values):
    ks = jax.random.split(key, 8)
    sc = 0.05
    nrm = jax.random.normal
    HE, HP = n_heads * d_keys, n_heads * d_values
    return dict(
        wq=sc * nrm(ks[0], (n_blocks, d_model, HE), jnp.float32),
        bq=sc * nrm(ks[1], (n_blocks, 1, HE), jnp.float32),
        wk=sc * nrm(ks[2], (n_blocks, d_model, HE), jnp.float32),
        bk=sc * nrm(ks[3], (n_blocks, 1, HE), jnp.float32),
        wv=sc * nrm(ks[4], (n_blocks, d_model, HP), jnp.float32),
        bv=sc * nrm(ks[5], (n_blocks, 1, HP), jnp.float32),
        wo=sc * nrm(ks[6], (n_blocks, HP, d_model), jnp.float32),
        bo=sc * nrm(ks[7], (n_blocks, 1, d_model), jnp.float32),
    )


def init_params(key, *, input_dims, n_latent, latent_dims, n_heads, d_keys, d_values,
                d_ff, n_blocks):
    assert latent_dims == input_dims, \
        "AttentionLayer(d_model=input_dims) requires latent_dims == input_dims"
    k = jax.random.split(key, 7)
    sc = 0.05
    nrm = jax.random.normal
    return dict(
        n_blocks=n_blocks, n_heads=n_heads, d_keys=d_keys, d_values=d_values,
        latent=nrm(k[0], (n_latent, latent_dims), jnp.float32),   # torch.randn init
        cross=init_attention_params(k[1], n_blocks, input_dims, n_heads, d_keys, d_values),
        self=init_attention_params(k[2], n_blocks, latent_dims, n_heads, d_keys, d_values),
        ln1w=jnp.ones((n_blocks, 1, latent_dims), jnp.float32),
        ln1b=jnp.zeros((n_blocks, 1, latent_dims), jnp.float32),
        w1=sc * nrm(k[3], (n_blocks, latent_dims, d_ff), jnp.float32),
        b1=sc * nrm(k[4], (n_blocks, 1, d_ff), jnp.float32),
        w2=sc * nrm(k[5], (n_blocks, d_ff, latent_dims), jnp.float32),
        b2=sc * nrm(k[6], (n_blocks, 1, latent_dims), jnp.float32),
        ln2w=jnp.ones((n_blocks, 1, latent_dims), jnp.float32),
        ln2b=jnp.zeros((n_blocks, 1, latent_dims), jnp.float32),
    )


def pack_params(params):
    """Pack per-block weights into 4 lane-concatenated slabs and fold the 1/sqrt(d_keys)
    softmax scale into the query projection (one-time host transform)."""
    H, E, P = params["n_heads"], params["d_keys"], params["d_values"]
    D = params["latent"].shape[1]
    F = params["w1"].shape[-1]
    lay = _slab_layout(H, E, P, D, F)
    temp = 1.0 / (E ** 0.5)
    c, s = params["cross"], params["self"]

    wd = jnp.concatenate([c["wq"] * temp, c["wk"], c["wv"],
                          s["wq"] * temp, s["wk"], s["wv"], params["w1"]], axis=-1)
    wo = jnp.concatenate([c["wo"], s["wo"]], axis=-1)
    bias = jnp.concatenate([c["bq"] * temp, c["bk"], c["bv"], c["bo"],
                            s["bq"] * temp, s["bk"], s["bv"], s["bo"],
                            params["b1"], params["b2"],
                            params["ln1w"], params["ln1b"],
                            params["ln2w"], params["ln2b"]], axis=-1)

    assert wd.shape[-1] == lay["wd_cols"] and bias.shape[-1] == lay["b_cols"]
    return dict(latent=params["latent"], wd=wd, wo=wo, w2=params["w2"], bias=bias,
                layout=lay, n_blocks=params["n_blocks"],
                n_heads=H, d_keys=E, d_values=P)


# --------------------------------------------------------------------------------------
# Pure-JAX reference (module semantics; same bf16 operand / f32 accumulation precision
# as the kernel so the comparison isolates the kernel's correctness).
# --------------------------------------------------------------------------------------
def _ref_mm(a, w):
    return jnp.einsum("bnd,df->bnf", a.astype(jnp.bfloat16), w.astype(jnp.bfloat16),
                      preferred_element_type=jnp.float32)


def _ref_mha(q_in, kv, p, i, n_heads, d_keys, d_values):
    f32, bf16 = jnp.float32, jnp.bfloat16
    B, Nq, _ = q_in.shape
    M = kv.shape[1]
    H, E, P = n_heads, d_keys, d_values
    Q = (_ref_mm(q_in, p["wq"][i]) + p["bq"][i]).reshape(B, Nq, H, E)
    K = (_ref_mm(kv, p["wk"][i]) + p["bk"][i]).reshape(B, M, H, E)
    V = (_ref_mm(kv, p["wv"][i]) + p["bv"][i]).reshape(B, M, H, P)
    s = jnp.einsum("bnhe,bmhe->bhnm", Q.astype(bf16), K.astype(bf16),
                   preferred_element_type=f32) * (1.0 / (E ** 0.5))
    a = jax.nn.softmax(s, axis=-1)
    ctx = jnp.einsum("bhnm,bmhp->bnhp", a.astype(bf16), V.astype(bf16),
                     preferred_element_type=f32).reshape(B, Nq, H * P)
    return _ref_mm(ctx, p["wo"][i]) + p["bo"][i]


def reference_forward(x, params):
    B = x.shape[0]
    H, E, P = params["n_heads"], params["d_keys"], params["d_values"]
    y = jnp.broadcast_to(params["latent"][None], (B,) + params["latent"].shape)
    for i in range(params["n_blocks"]):
        y = _ref_mha(y, x, params["cross"], i, H, E, P)
        a = _ref_mha(y, y, params["self"], i, H, E, P)
        z = _layernorm(y + a, params["ln1w"][i], params["ln1b"][i])
        f = jnp.maximum(_ref_mm(z, params["w1"][i]) + params["b1"][i], 0.0)
        f = _ref_mm(f, params["w2"][i]) + params["b2"][i]
        y = _layernorm(z + f, params["ln2w"][i], params["ln2b"][i])
    return y


# --------------------------------------------------------------------------------------
if __name__ == "__main__":
    B, M, D = 2, 16, 32          # batch, input sequence length, input_dims
    N_LATENT, LATENT_DIMS = 8, 32
    HEADS, D_KEYS, D_VALUES = 4, 8, 8
    D_FF, N_BLOCKS = 64, 2

    key = jax.random.PRNGKey(0)
    kx, kp = jax.random.split(key)
    x = jax.random.normal(kx, (B, M, D), jnp.float32)
    params = init_params(kp, input_dims=D, n_latent=N_LATENT, latent_dims=LATENT_DIMS,
                         n_heads=HEADS, d_keys=D_KEYS, d_values=D_VALUES,
                         d_ff=D_FF, n_blocks=N_BLOCKS)
    packed = pack_params(params)

    out = perceiver_forward(x, packed)
    out = jax.block_until_ready(out)
    assert out.shape == (B, N_LATENT, LATENT_DIMS), out.shape

    ref = jax.block_until_ready(reference_forward(x, params))
    err = float(jnp.max(jnp.abs(out - ref)))
    assert jnp.allclose(out, ref, rtol=2e-2, atol=2e-2), err

    print("KERNEL_OK")
</pallas_src>

<mosaic_0001>
module attributes {stable_mosaic.version = 11 : i64} {
  func.func @perceiver_kernel(%arg0: i32, %arg1: i32, %arg2: memref<1x16x32xf32, #tpu.memory_space<vmem>>, %arg3: memref<8x32xf32, #tpu.memory_space<vmem>>, %arg4: memref<1x32x256xf32, #tpu.memory_space<vmem>>, %arg5: memref<1x32x64xf32, #tpu.memory_space<vmem>>, %arg6: memref<1x64x32xf32, #tpu.memory_space<vmem>>, %arg7: memref<1x1x480xf32, #tpu.memory_space<vmem>>, %arg8: memref<1x1x256xf32, #tpu.memory_space<vmem>>, %arg9: memref<8x32xf32, #tpu.memory_space<vmem>>) attributes {dimension_semantics = [#tpu.dimension_semantics<parallel>, #tpu.dimension_semantics<arbitrary>], iteration_bounds = array<i64: 2, 2>, scalar_prefetch = 0 : i64, scratch_operands = 1 : i64, tpu.core_type = #tpu.core_type<tc>, window_params = [{transform_indices = @transform_0, window_bounds = array<i64: 1, 16, 32>}, {pipeline_mode = #tpu.pipeline_mode<synchronous>, transform_indices = @transform_1, window_bounds = array<i64: 8, 32>}, {transform_indices = @transform_2, window_bounds = array<i64: 1, 32, 256>}, {transform_indices = @transform_3, window_bounds = array<i64: 1, 32, 64>}, {transform_indices = @transform_4, window_bounds = array<i64: 1, 64, 32>}, {transform_indices = @transform_5, window_bounds = array<i64: 1, 1, 480>}, {transform_indices = @transform_6, window_bounds = array<i64: 1, 1, 256>}]} {
    %c0_i32 = arith.constant 0 : i32
    %0 = arith.cmpi eq, %arg1, %c0_i32 : i32
    %1 = arith.extui %0 : i1 to i32
    %c0_i32_0 = arith.constant 0 : i32
    %2 = arith.cmpi ne, %1, %c0_i32_0 : i32
    scf.if %2 {
      %c0_76 = arith.constant 0 : index
      %c0_77 = arith.constant 0 : index
      %238 = vector.load %arg3[%c0_76, %c0_77] : memref<8x32xf32, #tpu.memory_space<vmem>>, vector<8x32xf32>
      %c0_78 = arith.constant 0 : index
      %c0_79 = arith.constant 0 : index
      %239 = vector.load %arg9[%c0_78, %c0_79] : memref<8x32xf32, #tpu.memory_space<vmem>>, vector<8x32xf32>
      tpu.vector_store %arg9[%c0_78, %c0_79], %238 {strides = array<i32>} : memref<8x32xf32, #tpu.memory_space<vmem>>, vector<8x32xf32>,
    } else {
    }
    %c0 = arith.constant 0 : index
    %c0_1 = arith.constant 0 : index
    %c0_2 = arith.constant 0 : index
    %3 = vector.load %arg2[%c0, %c0_1, %c0_2] : memref<1x16x32xf32, #tpu.memory_space<vmem>>, vector<1x16x32xf32>
    %4 = vector.shape_cast %3 : vector<1x16x32xf32> to vector<16x32xf32>
    %c0_3 = arith.constant 0 : index
    %c0_4 = arith.constant 0 : index
    %5 = vector.load %arg9[%c0_3, %c0_4] : memref<8x32xf32, #tpu.memory_space<vmem>>, vector<8x32xf32>
    %c0_5 = arith.constant 0 : index
    %c0_6 = arith.constant 0 : index
    %c0_7 = arith.constant 0 : index
    %6 = vector.load %arg4[%c0_5, %c0_6, %c0_7] : memref<1x32x256xf32, #tpu.memory_space<vmem>>, vector<1x32x32xf32>
    %7 = vector.shape_cast %6 : vector<1x32x32xf32> to vector<32x32xf32>
    %8 = arith.truncf %5 : vector<8x32xf32> to vector<8x32xbf16>
    %9 = arith.truncf %7 : vector<32x32xf32> to vector<32x32xbf16>
    %cst = arith.constant dense<0.000000e+00> : vector<8x32xf32>
    %10 = tpu.matmul %8, %9, %cst {dimension_numbers = #tpu.dot_dimension_numbers<[1], [0], [0], [1], [0, 0, 1, 1], [], []>} : vector<8x32xbf16>, vector<32x32xbf16>, vector<8x32xf32> -> vector<8x32xf32>
    %c0_8 = arith.constant 0 : index
    %c0_9 = arith.constant 0 : index
    %c0_10 = arith.constant 0 : index
    %11 = vector.load %arg7[%c0_8, %c0_9, %c0_10] : memref<1x1x480xf32, #tpu.memory_space<vmem>>, vector<1x1x32xf32>
    %12 = vector.shape_cast %11 : vector<1x1x32xf32> to vector<1x32xf32>
    %13 = vector.broadcast %12 : vector<1x32xf32> to vector<8x32xf32>
    %14 = arith.addf %10, %13 : vector<8x32xf32>
    %c0_11 = arith.constant 0 : index
    %c0_12 = arith.constant 0 : index
    %c32 = arith.constant 32 : index
    %15 = vector.load %arg4[%c0_11, %c0_12, %c32] : memref<1x32x256xf32, #tpu.memory_space<vmem>>, vector<1x32x64xf32>
    %16 = vector.shape_cast %15 : vector<1x32x64xf32> to vector<32x64xf32>
    %17 = arith.truncf %4 : vector<16x32xf32> to vector<16x32xbf16>
    %18 = arith.truncf %16 : vector<32x64xf32> to vector<32x64xbf16>
    %cst_13 = arith.constant dense<0.000000e+00> : vector<16x64xf32>
    %19 = tpu.matmul %17, %18, %cst_13 {dimension_numbers = #tpu.dot_dimension_numbers<[1], [0], [0], [1], [0, 0, 1, 1], [], []>} : vector<16x32xbf16>, vector<32x64xbf16>, vector<16x64xf32> -> vector<16x64xf32>
    %c0_14 = arith.constant 0 : index
    %c0_15 = arith.constant 0 : index
    %c32_16 = arith.constant 32 : index
    %20 = vector.load %arg7[%c0_14, %c0_15, %c32_16] : memref<1x1x480xf32, #tpu.memory_space<vmem>>, vector<1x1x64xf32>
    %21 = vector.shape_cast %20 : vector<1x1x64xf32> to vector<1x64xf32>
    %22 = vector.broadcast %21 : vector<1x64xf32> to vector<16x64xf32>
    %23 = arith.addf %19, %22 : vector<16x64xf32>
    %24 = vector.extract_strided_slice %23 {offsets = [0, 0], sizes = [16, 32], strides = [1, 1]} : vector<16x64xf32> to vector<16x32xf32>
    %25 = vector.extract_strided_slice %23 {offsets = [0, 32], sizes = [16, 32], strides = [1, 1]} : vector<16x64xf32> to vector<16x32xf32>
    %26 = vector.extract_strided_slice %14 {offsets = [0, 0], sizes = [8, 8], strides = [1, 1]} : vector<8x32xf32> to vector<8x8xf32>
    %27 = vector.extract_strided_slice %14 {offsets = [0, 8], sizes = [8, 8], strides = [1, 1]} : vector<8x32xf32> to vector<8x8xf32>
    %28 = vector.extract_strided_slice %14 {offsets = [0, 16], sizes = [8, 8], strides = [1, 1]} : vector<8x32xf32> to vector<8x8xf32>
    %29 = vector.extract_strided_slice %14 {offsets = [0, 24], sizes = [8, 8], strides = [1, 1]} : vector<8x32xf32> to vector<8x8xf32>
    %30 = vector.shape_cast %26 : vector<8x8xf32> to vector<1x8x8xf32>
    %31 = vector.shape_cast %27 : vector<8x8xf32> to vector<1x8x8xf32>
    %32 = vector.shape_cast %28 : vector<8x8xf32> to vector<1x8x8xf32>
    %33 = vector.shape_cast %29 : vector<8x8xf32> to vector<1x8x8xf32>
    %34 = tpu.concatenate %30, %31, %32, %33 in 0 : vector<1x8x8xf32>, vector<1x8x8xf32>, vector<1x8x8xf32>, vector<1x8x8xf32> -> vector<4x8x8xf32>
    %35 = arith.truncf %34 : vector<4x8x8xf32> to vector<4x8x8xbf16>
    %36 = vector.extract_strided_slice %24 {offsets = [0, 0], sizes = [16, 8], strides = [1, 1]} : vector<16x32xf32> to vector<16x8xf32>
    %37 = vector.extract_strided_slice %24 {offsets = [0, 8], sizes = [16, 8], strides = [1, 1]} : vector<16x32xf32> to vector<16x8xf32>
    %38 = vector.extract_strided_slice %24 {offsets = [0, 16], sizes = [16, 8], strides = [1, 1]} : vector<16x32xf32> to vector<16x8xf32>
    %39 = vector.extract_strided_slice %24 {offsets = [0, 24], sizes = [16, 8], strides = [1, 1]} : vector<16x32xf32> to vector<16x8xf32>
    %40 = vector.shape_cast %36 : vector<16x8xf32> to vector<1x16x8xf32>
    %41 = vector.shape_cast %37 : vector<16x8xf32> to vector<1x16x8xf32>
    %42 = vector.shape_cast %38 : vector<16x8xf32> to vector<1x16x8xf32>
    %43 = vector.shape_cast %39 : vector<16x8xf32> to vector<1x16x8xf32>
    %44 = tpu.concatenate %40, %41, %42, %43 in 0 : vector<1x16x8xf32>, vector<1x16x8xf32>, vector<1x16x8xf32>, vector<1x16x8xf32> -> vector<4x16x8xf32>
    %45 = arith.truncf %44 : vector<4x16x8xf32> to vector<4x16x8xbf16>
    %46 = vector.extract_strided_slice %25 {offsets = [0, 0], sizes = [16, 8], strides = [1, 1]} : vector<16x32xf32> to vector<16x8xf32>
    %47 = vector.extract_strided_slice %25 {offsets = [0, 8], sizes = [16, 8], strides = [1, 1]} : vector<16x32xf32> to vector<16x8xf32>
    %48 = vector.extract_strided_slice %25 {offsets = [0, 16], sizes = [16, 8], strides = [1, 1]} : vector<16x32xf32> to vector<16x8xf32>
    %49 = vector.extract_strided_slice %25 {offsets = [0, 24], sizes = [16, 8], strides = [1, 1]} : vector<16x32xf32> to vector<16x8xf32>
    %50 = vector.shape_cast %46 : vector<16x8xf32> to vector<1x16x8xf32>
    %51 = vector.shape_cast %47 : vector<16x8xf32> to vector<1x16x8xf32>
    %52 = vector.shape_cast %48 : vector<16x8xf32> to vector<1x16x8xf32>
    %53 = vector.shape_cast %49 : vector<16x8xf32> to vector<1x16x8xf32>
    %54 = tpu.concatenate %50, %51, %52, %53 in 0 : vector<1x16x8xf32>, vector<1x16x8xf32>, vector<1x16x8xf32>, vector<1x16x8xf32> -> vector<4x16x8xf32>
    %55 = arith.truncf %54 : vector<4x16x8xf32> to vector<4x16x8xbf16>
    "tpu.trace_start"() <{level = 10 : i32, message = "hqe,hke->hqk"}> : () -> ()
    %cst_17 = arith.constant dense<0.000000e+00> : vector<4x8x16xf32>
    %56 = tpu.matmul %35, %45, %cst_17 {dimension_numbers = #tpu.dot_dimension_numbers<[2], [2], [1], [1], [0, 0, 0, 1, 1, 1], [0], [0]>} : vector<4x8x8xbf16>, vector<4x16x8xbf16>, vector<4x8x16xf32> -> vector<4x8x16xf32>
    "tpu.trace_stop"() : () -> ()
    %cst_18 = arith.constant dense<0xFF800000> : vector<4x8xf32>
    %57 = vector.multi_reduction <maximumf>, %56, %cst_18 [2] : vector<4x8x16xf32> to vector<4x8xf32>
    %58 = vector.shape_cast %57 : vector<4x8xf32> to vector<4x8x1xf32>
    %59 = vector.broadcast %58 : vector<4x8x1xf32> to vector<4x8x16xf32>
    %60 = arith.subf %56, %59 : vector<4x8x16xf32>
    %61 = math.exp %60 : vector<4x8x16xf32>
    %cst_19 = arith.constant dense<0.000000e+00> : vector<4x8xf32>
    %62 = vector.multi_reduction <add>, %61, %cst_19 [2] : vector<4x8x16xf32> to vector<4x8xf32>
    %63 = vector.shape_cast %62 : vector<4x8xf32> to vector<4x8x1xf32>
    %64 = tpu.reciprocal %63 : vector<4x8x1xf32> -> vector<4x8x1xf32>
    %65 = vector.broadcast %64 : vector<4x8x1xf32> to vector<4x8x16xf32>
    %66 = arith.mulf %61, %65 : vector<4x8x16xf32>
    %67 = arith.truncf %66 : vector<4x8x16xf32> to vector<4x8x16xbf16>
    "tpu.trace_start"() <{level = 10 : i32, message = "hqk,hkp->hqp"}> : () -> ()
    %cst_20 = arith.constant dense<0.000000e+00> : vector<4x8x8xf32>
    %68 = tpu.matmul %67, %55, %cst_20 {dimension_numbers = #tpu.dot_dimension_numbers<[2], [1], [1], [2], [0, 0, 0, 1, 1, 2], [0], [0]>} : vector<4x8x16xbf16>, vector<4x16x8xbf16>, vector<4x8x8xf32> -> vector<4x8x8xf32>
    "tpu.trace_stop"() : () -> ()
    %69 = vector.extract_strided_slice %68 {offsets = [0, 0, 0], sizes = [1, 8, 8], strides = [1, 1, 1]} : vector<4x8x8xf32> to vector<1x8x8xf32>
    %70 = vector.shape_cast %69 : vector<1x8x8xf32> to vector<8x8xf32>
    %71 = vector.extract_strided_slice %68 {offsets = [1, 0, 0], sizes = [1, 8, 8], strides = [1, 1, 1]} : vector<4x8x8xf32> to vector<1x8x8xf32>
    %72 = vector.shape_cast %71 : vector<1x8x8xf32> to vector<8x8xf32>
    %73 = vector.extract_strided_slice %68 {offsets = [2, 0, 0], sizes = [1, 8, 8], strides = [1, 1, 1]} : vector<4x8x8xf32> to vector<1x8x8xf32>
    %74 = vector.shape_cast %73 : vector<1x8x8xf32> to vector<8x8xf32>
    %75 = vector.extract_strided_slice %68 {offsets = [3, 0, 0], sizes = [1, 8, 8], strides = [1, 1, 1]} : vector<4x8x8xf32> to vector<1x8x8xf32>
    %76 = vector.shape_cast %75 : vector<1x8x8xf32> to vector<8x8xf32>
    %77 = tpu.concatenate %70, %72, %74, %76 in 1 : vector<8x8xf32>, vector<8x8xf32>, vector<8x8xf32>, vector<8x8xf32> -> vector<8x32xf32>
    %c0_21 = arith.constant 0 : index
    %c0_22 = arith.constant 0 : index
    %c0_23 = arith.constant 0 : index
    %78 = vector.load %arg5[%c0_21, %c0_22, %c0_23] : memref<1x32x64xf32, #tpu.memory_space<vmem>>, vector<1x32x32xf32>
    %79 = vector.shape_cast %78 : vector<1x32x32xf32> to vector<32x32xf32>
    %80 = arith.truncf %77 : vector<8x32xf32> to vector<8x32xbf16>
    %81 = arith.truncf %79 : vector<32x32xf32> to vector<32x32xbf16>
    %cst_24 = arith.constant dense<0.000000e+00> : vector<8x32xf32>
    %82 = tpu.matmul %80, %81, %cst_24 {dimension_numbers = #tpu.dot_dimension_numbers<[1], [0], [0], [1], [0, 0, 1, 1], [], []>} : vector<8x32xbf16>, vector<32x32xbf16>, vector<8x32xf32> -> vector<8x32xf32>
    %c0_25 = arith.constant 0 : index
    %c0_26 = arith.constant 0 : index
    %c96 = arith.constant 96 : index
    %83 = vector.load %arg7[%c0_25, %c0_26, %c96] : memref<1x1x480xf32, #tpu.memory_space<vmem>>, vector<1x1x32xf32>
    %84 = vector.shape_cast %83 : vector<1x1x32xf32> to vector<1x32xf32>
    %85 = vector.broadcast %84 : vector<1x32xf32> to vector<8x32xf32>
    %86 = arith.addf %82, %85 : vector<8x32xf32>
    %c0_27 = arith.constant 0 : index
    %c0_28 = arith.constant 0 : index
    %c96_29 = arith.constant 96 : index
    %87 = vector.load %arg4[%c0_27, %c0_28, %c96_29] : memref<1x32x256xf32, #tpu.memory_space<vmem>>, vector<1x32x96xf32>
    %88 = vector.shape_cast %87 : vector<1x32x96xf32> to vector<32x96xf32>
    %89 = arith.truncf %86 : vector<8x32xf32> to vector<8x32xbf16>
    %90 = arith.truncf %88 : vector<32x96xf32> to vector<32x96xbf16>
    %cst_30 = arith.constant dense<0.000000e+00> : vector<8x96xf32>
    %91 = tpu.matmul %89, %90, %cst_30 {dimension_numbers = #tpu.dot_dimension_numbers<[1], [0], [0], [1], [0, 0, 1, 1], [], []>} : vector<8x32xbf16>, vector<32x96xbf16>, vector<8x96xf32> -> vector<8x96xf32>
    %c0_31 = arith.constant 0 : index
    %c0_32 = arith.constant 0 : index
    %c128 = arith.constant 128 : index
    %92 = vector.load %arg7[%c0_31, %c0_32, %c128] : memref<1x1x480xf32, #tpu.memory_space<vmem>>, vector<1x1x96xf32>
    %93 = vector.shape_cast %92 : vector<1x1x96xf32> to vector<1x96xf32>
    %94 = vector.broadcast %93 : vector<1x96xf32> to vector<8x96xf32>
    %95 = arith.addf %91, %94 : vector<8x96xf32>
    %96 = vector.extract_strided_slice %95 {offsets = [0, 0], sizes = [8, 32], strides = [1, 1]} : vector<8x96xf32> to vector<8x32xf32>
    %97 = vector.extract_strided_slice %95 {offsets = [0, 32], sizes = [8, 32], strides = [1, 1]} : vector<8x96xf32> to vector<8x32xf32>
    %98 = vector.extract_strided_slice %95 {offsets = [0, 64], sizes = [8, 32], strides = [1, 1]} : vector<8x96xf32> to vector<8x32xf32>
    %99 = vector.extract_strided_slice %96 {offsets = [0, 0], sizes = [8, 8], strides = [1, 1]} : vector<8x32xf32> to vector<8x8xf32>
    %100 = vector.extract_strided_slice %96 {offsets = [0, 8], sizes = [8, 8], strides = [1, 1]} : vector<8x32xf32> to vector<8x8xf32>
    %101 = vector.extract_strided_slice %96 {offsets = [0, 16], sizes = [8, 8], strides = [1, 1]} : vector<8x32xf32> to vector<8x8xf32>
    %102 = vector.extract_strided_slice %96 {offsets = [0, 24], sizes = [8, 8], strides = [1, 1]} : vector<8x32xf32> to vector<8x8xf32>
    %103 = vector.shape_cast %99 : vector<8x8xf32> to vector<1x8x8xf32>
    %104 = vector.shape_cast %100 : vector<8x8xf32> to vector<1x8x8xf32>
    %105 = vector.shape_cast %101 : vector<8x8xf32> to vector<1x8x8xf32>
    %106 = vector.shape_cast %102 : vector<8x8xf32> to vector<1x8x8xf32>
    %107 = tpu.concatenate %103, %104, %105, %106 in 0 : vector<1x8x8xf32>, vector<1x8x8xf32>, vector<1x8x8xf32>, vector<1x8x8xf32> -> vector<4x8x8xf32>
    %108 = arith.truncf %107 : vector<4x8x8xf32> to vector<4x8x8xbf16>
    %109 = vector.extract_strided_slice %97 {offsets = [0, 0], sizes = [8, 8], strides = [1, 1]} : vector<8x32xf32> to vector<8x8xf32>
    %110 = vector.extract_strided_slice %97 {offsets = [0, 8], sizes = [8, 8], strides = [1, 1]} : vector<8x32xf32> to vector<8x8xf32>
    %111 = vector.extract_strided_slice %97 {offsets = [0, 16], sizes = [8, 8], strides = [1, 1]} : vector<8x32xf32> to vector<8x8xf32>
    %112 = vector.extract_strided_slice %97 {offsets = [0, 24], sizes = [8, 8], strides = [1, 1]} : vector<8x32xf32> to vector<8x8xf32>
    %113 = vector.shape_cast %109 : vector<8x8xf32> to vector<1x8x8xf32>
    %114 = vector.shape_cast %110 : vector<8x8xf32> to vector<1x8x8xf32>
    %115 = vector.shape_cast %111 : vector<8x8xf32> to vector<1x8x8xf32>
    %116 = vector.shape_cast %112 : vector<8x8xf32> to vector<1x8x8xf32>
    %117 = tpu.concatenate %113, %114, %115, %116 in 0 : vector<1x8x8xf32>, vector<1x8x8xf32>, vector<1x8x8xf32>, vector<1x8x8xf32> -> vector<4x8x8xf32>
    %118 = arith.truncf %117 : vector<4x8x8xf32> to vector<4x8x8xbf16>
    %119 = vector.extract_strided_slice %98 {offsets = [0, 0], sizes = [8, 8], strides = [1, 1]} : vector<8x32xf32> to vector<8x8xf32>
    %120 = vector.extract_strided_slice %98 {offsets = [0, 8], sizes = [8, 8], strides = [1, 1]} : vector<8x32xf32> to vector<8x8xf32>
    %121 = vector.extract_strided_slice %98 {offsets = [0, 16], sizes = [8, 8], strides = [1, 1]} : vector<8x32xf32> to vector<8x8xf32>
    %122 = vector.extract_strided_slice %98 {offsets = [0, 24], sizes = [8, 8], strides = [1, 1]} : vector<8x32xf32> to vector<8x8xf32>
    %123 = vector.shape_cast %119 : vector<8x8xf32> to vector<1x8x8xf32>
    %124 = vector.shape_cast %120 : vector<8x8xf32> to vector<1x8x8xf32>
    %125 = vector.shape_cast %121 : vector<8x8xf32> to vector<1x8x8xf32>
    %126 = vector.shape_cast %122 : vector<8x8xf32> to vector<1x8x8xf32>
    %127 = tpu.concatenate %123, %124, %125, %126 in 0 : vector<1x8x8xf32>, vector<1x8x8xf32>, vector<1x8x8xf32>, vector<1x8x8xf32> -> vector<4x8x8xf32>
    %128 = arith.truncf %127 : vector<4x8x8xf32> to vector<4x8x8xbf16>
    "tpu.trace_start"() <{level = 10 : i32, message = "hqe,hke->hqk"}> : () -> ()
    %cst_33 = arith.constant dense<0.000000e+00> : vector<4x8x8xf32>
    %129 = tpu.matmul %108, %118, %cst_33 {dimension_numbers = #tpu.dot_dimension_numbers<[2], [2], [1], [1], [0, 0, 0, 1, 1, 1], [0], [0]>} : vector<4x8x8xbf16>, vector<4x8x8xbf16>, vector<4x8x8xf32> -> vector<4x8x8xf32>
    "tpu.trace_stop"() : () -> ()
    %cst_34 = arith.constant dense<0xFF800000> : vector<4x8xf32>
    %130 = vector.multi_reduction <maximumf>, %129, %cst_34 [2] : vector<4x8x8xf32> to vector<4x8xf32>
    %131 = vector.shape_cast %130 : vector<4x8xf32> to vector<4x8x1xf32>
    %132 = vector.broadcast %131 : vector<4x8x1xf32> to vector<4x8x8xf32>
    %133 = arith.subf %129, %132 : vector<4x8x8xf32>
    %134 = math.exp %133 : vector<4x8x8xf32>
    %cst_35 = arith.constant dense<0.000000e+00> : vector<4x8xf32>
    %135 = vector.multi_reduction <add>, %134, %cst_35 [2] : vector<4x8x8xf32> to vector<4x8xf32>
    %136 = vector.shape_cast %135 : vector<4x8xf32> to vector<4x8x1xf32>
    %137 = tpu.reciprocal %136 : vector<4x8x1xf32> -> vector<4x8x1xf32>
    %138 = vector.broadcast %137 : vector<4x8x1xf32> to vector<4x8x8xf32>
    %139 = arith.mulf %134, %138 : vector<4x8x8xf32>
    %140 = arith.truncf %139 : vector<4x8x8xf32> to vector<4x8x8xbf16>
    "tpu.trace_start"() <{level = 10 : i32, message = "hqk,hkp->hqp"}> : () -> ()
    %cst_36 = arith.constant dense<0.000000e+00> : vector<4x8x8xf32>
    %141 = tpu.matmul %140, %128, %cst_36 {dimension_numbers = #tpu.dot_dimension_numbers<[2], [1], [1], [2], [0, 0, 0, 1, 1, 2], [0], [0]>} : vector<4x8x8xbf16>, vector<4x8x8xbf16>, vector<4x8x8xf32> -> vector<4x8x8xf32>
    "tpu.trace_stop"() : () -> ()
    %142 = vector.extract_strided_slice %141 {offsets = [0, 0, 0], sizes = [1, 8, 8], strides = [1, 1, 1]} : vector<4x8x8xf32> to vector<1x8x8xf32>
    %143 = vector.shape_cast %142 : vector<1x8x8xf32> to vector<8x8xf32>
    %144 = vector.extract_strided_slice %141 {offsets = [1, 0, 0], sizes = [1, 8, 8], strides = [1, 1, 1]} : vector<4x8x8xf32> to vector<1x8x8xf32>
    %145 = vector.shape_cast %144 : vector<1x8x8xf32> to vector<8x8xf32>
    %146 = vector.extract_strided_slice %141 {offsets = [2, 0, 0], sizes = [1, 8, 8], strides = [1, 1, 1]} : vector<4x8x8xf32> to vector<1x8x8xf32>
    %147 = vector.shape_cast %146 : vector<1x8x8xf32> to vector<8x8xf32>
    %148 = vector.extract_strided_slice %141 {offsets = [3, 0, 0], sizes = [1, 8, 8], strides = [1, 1, 1]} : vector<4x8x8xf32> to vector<1x8x8xf32>
    %149 = vector.shape_cast %148 : vector<1x8x8xf32> to vector<8x8xf32>
    %150 = tpu.concatenate %143, %145, %147, %149 in 1 : vector<8x8xf32>, vector<8x8xf32>, vector<8x8xf32>, vector<8x8xf32> -> vector<8x32xf32>
    %c0_37 = arith.constant 0 : index
    %c0_38 = arith.constant 0 : index
    %c32_39 = arith.constant 32 : index
    %151 = vector.load %arg5[%c0_37, %c0_38, %c32_39] : memref<1x32x64xf32, #tpu.memory_space<vmem>>, vector<1x32x32xf32>
    %152 = vector.shape_cast %151 : vector<1x32x32xf32> to vector<32x32xf32>
    %153 = arith.truncf %150 : vector<8x32xf32> to vector<8x32xbf16>
    %154 = arith.truncf %152 : vector<32x32xf32> to vector<32x32xbf16>
    %cst_40 = arith.constant dense<0.000000e+00> : vector<8x32xf32>
    %155 = tpu.matmul %153, %154, %cst_40 {dimension_numbers = #tpu.dot_dimension_numbers<[1], [0], [0], [1], [0, 0, 1, 1], [], []>} : vector<8x32xbf16>, vector<32x32xbf16>, vector<8x32xf32> -> vector<8x32xf32>
    %c0_41 = arith.constant 0 : index
    %c0_42 = arith.constant 0 : index
    %c224 = arith.constant 224 : index
    %156 = vector.load %arg7[%c0_41, %c0_42, %c224] : memref<1x1x480xf32, #tpu.memory_space<vmem>>, vector<1x1x32xf32>
    %157 = vector.shape_cast %156 : vector<1x1x32xf32> to vector<1x32xf32>
    %158 = vector.broadcast %157 : vector<1x32xf32> to vector<8x32xf32>
    %159 = arith.addf %155, %158 : vector<8x32xf32>
    %160 = arith.addf %86, %159 : vector<8x32xf32>
    %c0_43 = arith.constant 0 : index
    %c0_44 = arith.constant 0 : index
    %c352 = arith.constant 352 : index
    %161 = vector.load %arg7[%c0_43, %c0_44, %c352] : memref<1x1x480xf32, #tpu.memory_space<vmem>>, vector<1x1x32xf32>
    %162 = vector.shape_cast %161 : vector<1x1x32xf32> to vector<1x32xf32>
    %c0_45 = arith.constant 0 : index
    %c0_46 = arith.constant 0 : index
    %c384 = arith.constant 384 : index
    %163 = vector.load %arg7[%c0_45, %c0_46, %c384] : memref<1x1x480xf32, #tpu.memory_space<vmem>>, vector<1x1x32xf32>
    %164 = vector.shape_cast %163 : vector<1x1x32xf32> to vector<1x32xf32>
    %cst_47 = arith.constant dense<0.000000e+00> : vector<8xf32>
    %165 = vector.multi_reduction <add>, %160, %cst_47 [1] : vector<8x32xf32> to vector<8xf32>
    %166 = vector.shape_cast %165 : vector<8xf32> to vector<8x1xf32>
    %cst_48 = arith.constant 3.200000e+01 : f32
    %167 = vector.broadcast %cst_48 : f32 to vector<8x1xf32>
    %168 = arith.divf %166, %167 : vector<8x1xf32>
    %169 = arith.mulf %160, %160 : vector<8x32xf32>
    %cst_49 = arith.constant dense<0.000000e+00> : vector<8xf32>
    %170 = vector.multi_reduction <add>, %169, %cst_49 [1] : vector<8x32xf32> to vector<8xf32>
    %171 = vector.shape_cast %170 : vector<8xf32> to vector<8x1xf32>
    %cst_50 = arith.constant 3.200000e+01 : f32
    %172 = vector.broadcast %cst_50 : f32 to vector<8x1xf32>
    %173 = arith.divf %171, %172 : vector<8x1xf32>
    %174 = vector.broadcast %168 : vector<8x1xf32> to vector<8x32xf32>
    %175 = arith.subf %160, %174 : vector<8x32xf32>
    %176 = arith.mulf %168, %168 : vector<8x1xf32>
    %177 = arith.subf %173, %176 : vector<8x1xf32>
    %cst_51 = arith.constant 9.99999974E-6 : f32
    %178 = vector.broadcast %cst_51 : f32 to vector<8x1xf32>
    %179 = arith.addf %177, %178 : vector<8x1xf32>
    %180 = math.rsqrt %179 : vector<8x1xf32>
    %181 = vector.broadcast %180 : vector<8x1xf32> to vector<8x32xf32>
    %182 = arith.mulf %175, %181 : vector<8x32xf32>
    %183 = vector.broadcast %162 : vector<1x32xf32> to vector<8x32xf32>
    %184 = arith.mulf %182, %183 : vector<8x32xf32>
    %185 = vector.broadcast %164 : vector<1x32xf32> to vector<8x32xf32>
    %186 = arith.addf %184, %185 : vector<8x32xf32>
    %c0_52 = arith.constant 0 : index
    %c0_53 = arith.constant 0 : index
    %c192 = arith.constant 192 : index
    %187 = vector.load %arg4[%c0_52, %c0_53, %c192] : memref<1x32x256xf32, #tpu.memory_space<vmem>>, vector<1x32x64xf32>
    %188 = vector.shape_cast %187 : vector<1x32x64xf32> to vector<32x64xf32>
    %189 = arith.truncf %186 : vector<8x32xf32> to vector<8x32xbf16>
    %190 = arith.truncf %188 : vector<32x64xf32> to vector<32x64xbf16>
    %cst_54 = arith.constant dense<0.000000e+00> : vector<8x64xf32>
    %191 = tpu.matmul %189, %190, %cst_54 {dimension_numbers = #tpu.dot_dimension_numbers<[1], [0], [0], [1], [0, 0, 1, 1], [], []>} : vector<8x32xbf16>, vector<32x64xbf16>, vector<8x64xf32> -> vector<8x64xf32>
    %c0_55 = arith.constant 0 : index
    %c0_56 = arith.constant 0 : index
    %c256 = arith.constant 256 : index
    %192 = vector.load %arg7[%c0_55, %c0_56, %c256] : memref<1x1x480xf32, #tpu.memory_space<vmem>>, vector<1x1x64xf32>
    %193 = vector.shape_cast %192 : vector<1x1x64xf32> to vector<1x64xf32>
    %194 = vector.broadcast %193 : vector<1x64xf32> to vector<8x64xf32>
    %195 = arith.addf %191, %194 : vector<8x64xf32>
    %cst_57 = arith.constant 0.000000e+00 : f32
    %196 = vector.broadcast %cst_57 : f32 to vector<8x64xf32>
    %197 = arith.maximumf %195, %196 : vector<8x64xf32>
    %c0_58 = arith.constant 0 : index
    %c0_59 = arith.constant 0 : index
    %c0_60 = arith.constant 0 : index
    %198 = vector.load %arg6[%c0_58, %c0_59, %c0_60] : memref<1x64x32xf32, #tpu.memory_space<vmem>>, vector<1x64x32xf32>
    %199 = vector.shape_cast %198 : vector<1x64x32xf32> to vector<64x32xf32>
    %200 = arith.truncf %197 : vector<8x64xf32> to vector<8x64xbf16>
    %201 = arith.truncf %199 : vector<64x32xf32> to vector<64x32xbf16>
    %cst_61 = arith.constant dense<0.000000e+00> : vector<8x32xf32>
    %202 = tpu.matmul %200, %201, %cst_61 {dimension_numbers = #tpu.dot_dimension_numbers<[1], [0], [0], [1], [0, 0, 1, 1], [], []>} : vector<8x64xbf16>, vector<64x32xbf16>, vector<8x32xf32> -> vector<8x32xf32>
    %c0_62 = arith.constant 0 : index
    %c0_63 = arith.constant 0 : index
    %c320 = arith.constant 320 : index
    %203 = vector.load %arg7[%c0_62, %c0_63, %c320] : memref<1x1x480xf32, #tpu.memory_space<vmem>>, vector<1x1x32xf32>
    %204 = vector.shape_cast %203 : vector<1x1x32xf32> to vector<1x32xf32>
    %205 = vector.broadcast %204 : vector<1x32xf32> to vector<8x32xf32>
    %206 = arith.addf %202, %205 : vector<8x32xf32>
    %207 = arith.addf %186, %206 : vector<8x32xf32>
    %c0_64 = arith.constant 0 : index
    %c0_65 = arith.constant 0 : index
    %c416 = arith.constant 416 : index
    %208 = vector.load %arg7[%c0_64, %c0_65, %c416] : memref<1x1x480xf32, #tpu.memory_space<vmem>>, vector<1x1x32xf32>
    %209 = vector.shape_cast %208 : vector<1x1x32xf32> to vector<1x32xf32>
    %c0_66 = arith.constant 0 : index
    %c0_67 = arith.constant 0 : index
    %c448 = arith.constant 448 : index
    %210 = vector.load %arg7[%c0_66, %c0_67, %c448] : memref<1x1x480xf32, #tpu.memory_space<vmem>>, vector<1x1x32xf32>
    %211 = vector.shape_cast %210 : vector<1x1x32xf32> to vector<1x32xf32>
    %cst_68 = arith.constant dense<0.000000e+00> : vector<8xf32>
    %212 = vector.multi_reduction <add>, %207, %cst_68 [1] : vector<8x32xf32> to vector<8xf32>
    %213 = vector.shape_cast %212 : vector<8xf32> to vector<8x1xf32>
    %cst_69 = arith.constant 3.200000e+01 : f32
    %214 = vector.broadcast %cst_69 : f32 to vector<8x1xf32>
    %215 = arith.divf %213, %214 : vector<8x1xf32>
    %216 = arith.mulf %207, %207 : vector<8x32xf32>
    %cst_70 = arith.constant dense<0.000000e+00> : vector<8xf32>
    %217 = vector.multi_reduction <add>, %216, %cst_70 [1] : vector<8x32xf32> to vector<8xf32>
    %218 = vector.shape_cast %217 : vector<8xf32> to vector<8x1xf32>
    %cst_71 = arith.constant 3.200000e+01 : f32
    %219 = vector.broadcast %cst_71 : f32 to vector<8x1xf32>
    %220 = arith.divf %218, %219 : vector<8x1xf32>
    %221 = vector.broadcast %215 : vector<8x1xf32> to vector<8x32xf32>
    %222 = arith.subf %207, %221 : vector<8x32xf32>
    %223 = arith.mulf %215, %215 : vector<8x1xf32>
    %224 = arith.subf %220, %223 : vector<8x1xf32>
    %cst_72 = arith.constant 9.99999974E-6 : f32
    %225 = vector.broadcast %cst_72 : f32 to vector<8x1xf32>
    %226 = arith.addf %224, %225 : vector<8x1xf32>
    %227 = math.rsqrt %226 : vector<8x1xf32>
    %228 = vector.broadcast %227 : vector<8x1xf32> to vector<8x32xf32>
    %229 = arith.mulf %222, %228 : vector<8x32xf32>
    %230 = vector.broadcast %209 : vector<1x32xf32> to vector<8x32xf32>
    %231 = arith.mulf %229, %230 : vector<8x32xf32>
    %232 = vector.broadcast %211 : vector<1x32xf32> to vector<8x32xf32>
    %233 = arith.addf %231, %232 : vector<8x32xf32>
    %c0_73 = arith.constant 0 : index
    %c0_74 = arith.constant 0 : index
    %234 = vector.load %arg9[%c0_73, %c0_74] : memref<8x32xf32, #tpu.memory_space<vmem>>, vector<8x32xf32>
    tpu.vector_store %arg9[%c0_73, %c0_74], %233 {strides = array<i32>} : memref<8x32xf32, #tpu.memory_space<vmem>>, vector<8x32xf32>,
    %c1_i32 = arith.constant 1 : i32
    %235 = arith.cmpi eq, %arg1, %c1_i32 : i32
    %236 = arith.extui %235 : i1 to i32
    %c0_i32_75 = arith.constant 0 : i32
    %237 = arith.cmpi ne, %236, %c0_i32_75 : i32
    scf.if %237 {
      %238 = vector.extract_strided_slice %233 {offsets = [0, 0], sizes = [1, 32], strides = [1, 1]} : vector<8x32xf32> to vector<1x32xf32>
      %239 = vector.extract_strided_slice %233 {offsets = [1, 0], sizes = [1, 32], strides = [1, 1]} : vector<8x32xf32> to vector<1x32xf32>
      %240 = vector.extract_strided_slice %233 {offsets = [2, 0], sizes = [1, 32], strides = [1, 1]} : vector<8x32xf32> to vector<1x32xf32>
      %241 = vector.extract_strided_slice %233 {offsets = [3, 0], sizes = [1, 32], strides = [1, 1]} : vector<8x32xf32> to vector<1x32xf32>
      %242 = vector.extract_strided_slice %233 {offsets = [4, 0], sizes = [1, 32], strides = [1, 1]} : vector<8x32xf32> to vector<1x32xf32>
      %243 = vector.extract_strided_slice %233 {offsets = [5, 0], sizes = [1, 32], strides = [1, 1]} : vector<8x32xf32> to vector<1x32xf32>
      %244 = vector.extract_strided_slice %233 {offsets = [6, 0], sizes = [1, 32], strides = [1, 1]} : vector<8x32xf32> to vector<1x32xf32>
      %245 = vector.extract_strided_slice %233 {offsets = [7, 0], sizes = [1, 32], strides = [1, 1]} : vector<8x32xf32> to vector<1x32xf32>
      %246 = tpu.concatenate %238, %239, %240, %241, %242, %243, %244, %245 in 1 : vector<1x32xf32>, vector<1x32xf32>, vector<1x32xf32>, vector<1x32xf32>, vector<1x32xf32>, vector<1x32xf32>, vector<1x32xf32>, vector<1x32xf32> -> vector<1x256xf32>
      %c0_76 = arith.constant 0 : index
      %c0_77 = arith.constant 0 : index
      %c0_78 = arith.constant 0 : index
      %247 = vector.load %arg8[%c0_76, %c0_77, %c0_78] : memref<1x1x256xf32, #tpu.memory_space<vmem>>, vector<1x1x256xf32>
      %248 = vector.shape_cast %247 : vector<1x1x256xf32> to vector<1x256xf32>
      %249 = vector.shape_cast %246 : vector<1x256xf32> to vector<1x1x256xf32>
      tpu.vector_store %arg8[%c0_76, %c0_77, %c0_78], %249 {strides = array<i32>} : memref<1x1x256xf32, #tpu.memory_space<vmem>>, vector<1x1x256xf32>,
    } else {
    }
    return
  }
  func.func @transform_0(%arg0: i32, %arg1: i32) -> (i32, i32, i32) {
    %c0_i32 = arith.constant 0 : i32
    %c0_i32_0 = arith.constant 0 : i32
    %c0_i32_1 = arith.constant 0 : i32
    return %arg0, %c0_i32, %c0_i32_0 : i32, i32, i32
  }
  func.func @transform_1(%arg0: i32, %arg1: i32) -> (i32, i32) {
    %c0_i32 = arith.constant 0 : i32
    %c0_i32_0 = arith.constant 0 : i32
    %c0_i32_1 = arith.constant 0 : i32
    return %c0_i32, %c0_i32_0 : i32, i32
  }
  func.func @transform_2(%arg0: i32, %arg1: i32) -> (i32, i32, i32) {
    %c0_i32 = arith.constant 0 : i32
    %c0_i32_0 = arith.constant 0 : i32
    %c0_i32_1 = arith.constant 0 : i32
    return %arg1, %c0_i32, %c0_i32_0 : i32, i32, i32
  }
  func.func @transform_3(%arg0: i32, %arg1: i32) -> (i32, i32, i32) {
    %c0_i32 = arith.constant 0 : i32
    %c0_i32_0 = arith.constant 0 : i32
    %c0_i32_1 = arith.constant 0 : i32
    return %arg1, %c0_i32, %c0_i32_0 : i32, i32, i32
  }
  func.func @transform_4(%arg0: i32, %arg1: i32) -> (i32, i32, i32) {
    %c0_i32 = arith.constant 0 : i32
    %c0_i32_0 = arith.constant 0 : i32
    %c0_i32_1 = arith.constant 0 : i32
    return %arg1, %c0_i32, %c0_i32_0 : i32, i32, i32
  }
  func.func @transform_5(%arg0: i32, %arg1: i32) -> (i32, i32, i32) {
    %c0_i32 = arith.constant 0 : i32
    %c0_i32_0 = arith.constant 0 : i32
    %c0_i32_1 = arith.constant 0 : i32
    return %arg1, %c0_i32, %c0_i32_0 : i32, i32, i32
  }
  func.func @transform_6(%arg0: i32, %arg1: i32) -> (i32, i32, i32) {
    %c0_i32 = arith.constant 0 : i32
    %c0_i32_0 = arith.constant 0 : i32
    %c0_i32_1 = arith.constant 0 : i32
    return %arg0, %c0_i32, %c0_i32_0 : i32, i32, i32
  }
}

</mosaic_0001>

<llo_original>
// kernel: tpu_custom_call.1
$region0: #{tpu_custom_call.1}
  #allocation0 [shape = 'u32[]', space=smem, size = 0x4, offset = 0x4, fixed_abs, tag = 'smem constant byte address 0x4 - core index']
  #allocation1 [shape = 'u32[144,128]{1,0:T(1,128)}', space=vmem, size = 0x12000, scoped, tag = 'internal scratch']
  #allocation2 [shape = 'f32[8,32]{1,0:T(8,128)}', space=vmem, size = 0x1000, scoped, tag = 'scratch operand']
  %s0 = inlined_call_operand.hbm [shape: f32[2,16,32], index: 0, kind: input, shape index: {}]
  %s1 = inlined_call_operand.hbm [shape: f32[8,32], index: 1, kind: input, shape index: {}]
  %s2 = inlined_call_operand.vmem [shape: f32[2,32,256], index: 2, kind: input, shape index: {}]
  %s3 = inlined_call_operand.vmem [shape: f32[2,32,64], index: 3, kind: input, shape index: {}]
  %s4 = inlined_call_operand.vmem [shape: f32[2,64,32], index: 4, kind: input, shape index: {}]
  %s5 = inlined_call_operand.vmem [shape: f32[2,1,480], index: 5, kind: input, shape index: {}]
  %s6 = inlined_call_operand.hbm [shape: f32[2,1,256], index: 6, kind: output, shape index: {}]
  %s7 = sld [smem:[#allocation0]]
  $region73: #{tpu_custom_call.1} parent=0
    _
  %s9 = ssub.s32 1, %s7
  %s10 = scalar_select 0, %s9, %s7
  $region1: #{tpu_custom_call.1} parent=0
    #allocation3 [shape = 'u8[16384]{0}', space=vmem, size = 0x4000, scoped, tag = 'input window, operand 0']
    #allocation4 [shape = 's32[2]{0}', space=sflag, size = 0x8, scoped, tag = 'scoped memory for tpu_custom_call.1']
    #allocation5 [shape = 's32[2]{0}', space=sflag, size = 0x8, scoped, tag = 'scoped memory for tpu_custom_call.1']
    #allocation6 [shape = 'u8[4096]{0}', space=vmem, size = 0x1000, scoped, tag = 'input window, operand 1, single buffered']
    #allocation7 [shape = 's32[1]{0}', space=sflag, size = 0x4, scoped, tag = 'scoped memory for tpu_custom_call.1']
    #allocation8 [shape = 'u8[2048]{0}', space=vmem, size = 0x800, scoped, tag = 'output window, operand 0']
    %11 = vsyncpa [#allocation4], 0
    %s12 = scalar_lea.sflag [#allocation4], 1
    %13 = vsyncpa %s12, 0
    %14 = vsyncpa [#allocation7], 0
    %15 = vsyncpa [#allocation5], 0
    %s16 = scalar_lea.sflag [#allocation5], 1
    %17 = vsyncpa %s16, 0
    loop: start=0, step=1, limit=6
    $region2: #{tpu_custom_call.1} parent=1 // loop_pre_header
      _
    $region3: #{tpu_custom_call.1} parent=1 // loop_header
      %s19 = sphi 0, %s23
      %p20 = scmp.ge.s32.totalorder %s19, 6
      %s26 = sphi 0, %s38
      %s27 = sphi 0, %s34
      %s28 = sphi 0, %s26
      %s29 = sphi 0, %s27
      %s30 = sphi 0, %s28
      %s31 = sphi 0, %s29
      %s41 = sphi 0, %s43
      %s44 = sphi 0, %s41
      %s45 = sphi 0, %s44
      %s61 = sphi 0, %s45
      %s65 = sphi 0, %s65
      %s67 = sphi 0, %s65
      %s68 = sphi 0, %s67
      %s82 = sphi 0, %s68
      %s88 = sphi 0, %s90
      %s91 = sphi 0, %s88
      %s92 = sphi 0, %s91
      %s108 = sphi 0, %s92
      %s114 = sphi 0, %s116
      %s117 = sphi 0, %s114
      %s118 = sphi 0, %s117
      %s134 = sphi 0, %s118
      %s140 = sphi 0, %s142
      %s143 = sphi 0, %s140
      %s144 = sphi 0, %s143
      %s160 = sphi 0, %s144
      %s166 = sphi 0, %s168
      %s169 = sphi 0, %s166
      %s170 = sphi 0, %s169
      %s186 = sphi 0, %s170
      %s192 = sphi 0, %s194
      %s195 = sphi 0, %s192
      %s196 = sphi 0, %s195
      %s212 = sphi 0, %s196
    $region4: #{tpu_custom_call.1} parent=1 // loop_header_branch
      %22 = sbr.rel (%p20) target = $region8
    $region5: #{tpu_custom_call.1} parent=1 // loop_body
      %s24 = ssub.s32 %s19, 1
      %s25 = ssub.s32 %s19, 2
      %s32 = sadd.s32 1, %s27
      %p33 = scmp.ge.s32.totalorder %s32, 2
      %s34 = scalar_select %p33, 0, %s32
      %s35 = sadd.s32 1, %s26
      %s36 = scalar_select %p33, %s35, %s26
      %p37 = scmp.ge.s32.totalorder %s36, 2
      %s38 = scalar_select %p37, 0, %s36
      %s39 = ssub.s32 %s26, %s38
      %p40 = scmp.eq.s32.totalorder %s39, 0
      %s42 = sadd.s32 %s41, 1
      %s43 = scalar_select %p40, %s41, %s42
      %p46 = pneg %p40
      %p47 = scmp.eq.s32.totalorder %s19, 3
      %p48 = por %p46, %p47
      %p49 = scmp.ne.s32.totalorder %s41, %s44
      %p50 = scmp.eq.s32.totalorder %s19, 0
      %p51 = por %p49, %p50
      %p52 = scmp.ne.s32.totalorder %s41, %s44
      %p53 = scmp.eq.s32.totalorder %s24, 3
      %p54 = por %p52, %p53
      %p55 = scmp.ne.s32.totalorder %s44, %s45
      %p56 = scmp.eq.s32.totalorder %s24, 0
      %p57 = por %p55, %p56
      %p58 = scmp.ne.s32.totalorder %s44, %s45
      %p59 = scmp.eq.s32.totalorder %s25, 3
      %p60 = por %p58, %p59
      %p62 = scmp.ne.s32.totalorder %s45, %s61
      %p63 = scmp.eq.s32.totalorder %s25, 0
      %p64 = por %p62, %p63
      %s66 = sadd.s32 %s65, 1
      %p69 = scmp.eq.s32.totalorder %s19, 3
      %p70 = scmp.ne.s32.totalorder %s65, %s67
      %p71 = scmp.eq.s32.totalorder %s19, 0
      %p72 = por %p70, %p71
      %p73 = scmp.ne.s32.totalorder %s65, %s67
      %p74 = scmp.eq.s32.totalorder %s24, 3
      %p75 = por %p73, %p74
      %p76 = scmp.ne.s32.totalorder %s67, %s68
      %p77 = scmp.eq.s32.totalorder %s24, 0
      %p78 = por %p76, %p77
      %p79 = scmp.ne.s32.totalorder %s67, %s68
      %p80 = scmp.eq.s32.totalorder %s25, 3
      %p81 = por %p79, %p80
      %p83 = scmp.ne.s32.totalorder %s68, %s82
      %p84 = scmp.eq.s32.totalorder %s25, 0
      %p85 = por %p83, %p84
      %s86 = ssub.s32 %s27, %s34
      %p87 = scmp.eq.s32.totalorder %s86, 0
      %s89 = sadd.s32 %s88, 1
      %s90 = scalar_select %p87, %s88, %s89
      %p93 = pneg %p87
      %p94 = scmp.eq.s32.totalorder %s19, 3
      %p95 = por %p93, %p94
      %p96 = scmp.ne.s32.totalorder %s88, %s91
      %p97 = scmp.eq.s32.totalorder %s19, 0
      %p98 = por %p96, %p97
      %p99 = scmp.ne.s32.totalorder %s88, %s91
      %p100 = scmp.eq.s32.totalorder %s24, 3
      %p101 = por %p99, %p100
      %p102 = scmp.ne.s32.totalorder %s91, %s92
      %p103 = scmp.eq.s32.totalorder %s24, 0
      %p104 = por %p102, %p103
      %p105 = scmp.ne.s32.totalorder %s91, %s92
      %p106 = scmp.eq.s32.totalorder %s25, 3
      %p107 = por %p105, %p106
      %p109 = scmp.ne.s32.totalorder %s92, %s108
      %p110 = scmp.eq.s32.totalorder %s25, 0
      %p111 = por %p109, %p110
      %s112 = ssub.s32 %s27, %s34
      %p113 = scmp.eq.s32.totalorder %s112, 0
      %s115 = sadd.s32 %s114, 1
      %s116 = scalar_select %p113, %s114, %s115
      %p119 = pneg %p113
      %p120 = scmp.eq.s32.totalorder %s19, 3
      %p121 = por %p119, %p120
      %p122 = scmp.ne.s32.totalorder %s114, %s117
      %p123 = scmp.eq.s32.totalorder %s19, 0
      %p124 = por %p122, %p123
      %p125 = scmp.ne.s32.totalorder %s114, %s117
      %p126 = scmp.eq.s32.totalorder %s24, 3
      %p127 = por %p125, %p126
      %p128 = scmp.ne.s32.totalorder %s117, %s118
      %p129 = scmp.eq.s32.totalorder %s24, 0
      %p130 = por %p128, %p129
      %p131 = scmp.ne.s32.totalorder %s117, %s118
      %p132 = scmp.eq.s32.totalorder %s25, 3
      %p133 = por %p131, %p132
      %p135 = scmp.ne.s32.totalorder %s118, %s134
      %p136 = scmp.eq.s32.totalorder %s25, 0
      %p137 = por %p135, %p136
      %s138 = ssub.s32 %s27, %s34
      %p139 = scmp.eq.s32.totalorder %s138, 0
      %s141 = sadd.s32 %s140, 1
      %s142 = scalar_select %p139, %s140, %s141
      %p145 = pneg %p139
      %p146 = scmp.eq.s32.totalorder %s19, 3
      %p147 = por %p145, %p146
      %p148 = scmp.ne.s32.totalorder %s140, %s143
      %p149 = scmp.eq.s32.totalorder %s19, 0
      %p150 = por %p148, %p149
      %p151 = scmp.ne.s32.totalorder %s140, %s143
      %p152 = scmp.eq.s32.totalorder %s24, 3
      %p153 = por %p151, %p152
      %p154 = scmp.ne.s32.totalorder %s143, %s144
      %p155 = scmp.eq.s32.totalorder %s24, 0
      %p156 = por %p154, %p155
      %p157 = scmp.ne.s32.totalorder %s143, %s144
      %p158 = scmp.eq.s32.totalorder %s25, 3
      %p159 = por %p157, %p158
      %p161 = scmp.ne.s32.totalorder %s144, %s160
      %p162 = scmp.eq.s32.totalorder %s25, 0
      %p163 = por %p161, %p162
      %s164 = ssub.s32 %s27, %s34
      %p165 = scmp.eq.s32.totalorder %s164, 0
      %s167 = sadd.s32 %s166, 1
      %s168 = scalar_select %p165, %s166, %s167
      %p171 = pneg %p165
      %p172 = scmp.eq.s32.totalorder %s19, 3
      %p173 = por %p171, %p172
      %p174 = scmp.ne.s32.totalorder %s166, %s169
      %p175 = scmp.eq.s32.totalorder %s19, 0
      %p176 = por %p174, %p175
      %p177 = scmp.ne.s32.totalorder %s166, %s169
      %p178 = scmp.eq.s32.totalorder %s24, 3
      %p179 = por %p177, %p178
      %p180 = scmp.ne.s32.totalorder %s169, %s170
      %p181 = scmp.eq.s32.totalorder %s24, 0
      %p182 = por %p180, %p181
      %p183 = scmp.ne.s32.totalorder %s169, %s170
      %p184 = scmp.eq.s32.totalorder %s25, 3
      %p185 = por %p183, %p184
      %p187 = scmp.ne.s32.totalorder %s170, %s186
      %p188 = scmp.eq.s32.totalorder %s25, 0
      %p189 = por %p187, %p188
      %s190 = ssub.s32 %s26, %s38
      %p191 = scmp.eq.s32.totalorder %s190, 0
      %s193 = sadd.s32 %s192, 1
      %s194 = scalar_select %p191, %s192, %s193
      %p197 = pneg %p191
      %p198 = scmp.eq.s32.totalorder %s19, 3
      %p199 = por %p197, %p198
      %p200 = scmp.ne.s32.totalorder %s192, %s195
      %p201 = scmp.eq.s32.totalorder %s19, 0
      %p202 = por %p200, %p201
      %p203 = scmp.ne.s32.totalorder %s192, %s195
      %p204 = scmp.eq.s32.totalorder %s24, 3
      %p205 = por %p203, %p204
      %p206 = scmp.ne.s32.totalorder %s195, %s196
      %p207 = scmp.eq.s32.totalorder %s24, 0
      %p208 = por %p206, %p207
      %p209 = scmp.ne.s32.totalorder %s195, %s196
      %p210 = scmp.eq.s32.totalorder %s25, 3
      %p211 = por %p209, %p210
      %p213 = scmp.ne.s32.totalorder %s196, %s212
      %p214 = scmp.eq.s32.totalorder %s25, 0
      %p215 = por %p213, %p214
      %p216 = scmp.le.s32.totalorder 1, %s19
      %p217 = scmp.lt.s32.totalorder %s19, 5
      %p218 = pnand %p216, %p217
      %p219 = pneg %p218
      // Predicated region
      $region9: #{tpu_custom_call.1} parent=5 // pred_check
        _
      $region10: #{tpu_custom_call.1} parent=5 // pred_check_branch
        %221 = sbr.rel (%p218) target = $region12
      $region11: #{tpu_custom_call.1} parent=5 // pred_region
        %s222 = ssub.s32 %s19, 1
        // Predicated region
        $region13: #{tpu_custom_call.1} parent=11 // pred_check
          %p223 = pneg %p78
        $region14: #{tpu_custom_call.1} parent=11 // pred_check_branch
          %225 = sbr.rel (%p223) target = $region16
        $region15: #{tpu_custom_call.1} parent=11 // pred_region
          %s227 = ssub.s32 128, 128
          %228 = vsyncadd [#allocation7], %s227
          %s230 = sshll.u32 [#allocation6], 4
          %s231 = int_to_ptr.vmem [resolvable:$true] %s230
          %233 = dma.hbm_to_vmem [thread:$0]  %s1, 128, %s231, [#allocation7]
        $region16: #{tpu_custom_call.1} parent=11 // pred_fallthru
          _
      $region12: #{tpu_custom_call.1} parent=5 // pred_fallthru
        _
      %p234 = scmp.lt.s32.totalorder %s19, 4
      // Predicated region
      $region17: #{tpu_custom_call.1} parent=5 // pred_check
        %p235 = pneg %p234
      $region18: #{tpu_custom_call.1} parent=5 // pred_check_branch
        %237 = sbr.rel (%p235) target = $region20
      $region19: #{tpu_custom_call.1} parent=5 // pred_region
        // Predicated region
        $region21: #{tpu_custom_call.1} parent=19 // pred_check
          %p238 = pneg %p51
        $region22: #{tpu_custom_call.1} parent=19 // pred_check_branch
          %240 = sbr.rel (%p238) target = $region24
        $region23: #{tpu_custom_call.1} parent=19 // pred_region
          %s241 = sand.u32 %s41, 1
          %s242 = scalar_lea.sflag [#allocation4], %s241
          %s243 = sand.u32 %s41, 1
          %s244 = smul.addr %s243, 16
          %s245 = scalar_lea.vmem [#allocation3], %s244
          %s247 = ssub.s32 256, 256
          %248 = vsyncadd %s242, %s247
          %s249 = smul.addr %s26, 2
          %s250 = smul.addr %s249, 128
          %s251 = scalar_lea.hbm %s0, %s250
          %s252 = sshll.u32 %s245, 4
          %s253 = int_to_ptr.vmem [resolvable:$true] %s252
          %258 = dma.hbm_to_vmem [thread:$0]  %s251, 256, %s253, %s242, 128, 128, 8
        $region24: #{tpu_custom_call.1} parent=19 // pred_fallthru
          _
        // Predicated region
        $region25: #{tpu_custom_call.1} parent=19 // pred_check
          %p259 = pneg %p98
        $region26: #{tpu_custom_call.1} parent=19 // pred_check_branch
          %261 = sbr.rel (%p259) target = $region28
        $region27: #{tpu_custom_call.1} parent=19 // pred_region
          %p262 = scmp.lt.s32.totalorder %s27, 1
          %s263 = scalar_select %p262, %s27, 1
          %s264 = smul.addr %s263, 8
          %s265 = smul.addr %s264, 8
          %s266 = scalar_lea.vmem %s2, %s265
        $region28: #{tpu_custom_call.1} parent=19 // pred_fallthru
          _
        // Predicated region
        $region29: #{tpu_custom_call.1} parent=19 // pred_check
          %p267 = pneg %p124
        $region30: #{tpu_custom_call.1} parent=19 // pred_check_branch
          %269 = sbr.rel (%p267) target = $region32
        $region31: #{tpu_custom_call.1} parent=19 // pred_region
          %p270 = scmp.lt.s32.totalorder %s27, 1
          %s271 = scalar_select %p270, %s27, 1
          %s272 = smul.addr %s271, 4
          %s273 = smul.addr %s272, 8
          %s274 = scalar_lea.vmem %s3, %s273
        $region32: #{tpu_custom_call.1} parent=19 // pred_fallthru
          _
        // Predicated region
        $region33: #{tpu_custom_call.1} parent=19 // pred_check
          %p275 = pneg %p150
        $region34: #{tpu_custom_call.1} parent=19 // pred_check_branch
          %277 = sbr.rel (%p275) target = $region36
        $region35: #{tpu_custom_call.1} parent=19 // pred_region
          %p278 = scmp.lt.s32.totalorder %s27, 1
          %s279 = scalar_select %p278, %s27, 1
          %s280 = smul.addr %s279, 8
          %s281 = smul.addr %s280, 8
          %s282 = scalar_lea.vmem %s4, %s281
        $region36: #{tpu_custom_call.1} parent=19 // pred_fallthru
          _
        // Predicated region
        $region37: #{tpu_custom_call.1} parent=19 // pred_check
          %p283 = pneg %p176
        $region38: #{tpu_custom_call.1} parent=19 // pred_check_branch
          %285 = sbr.rel (%p283) target = $region40
        $region39: #{tpu_custom_call.1} parent=19 // pred_region
          %p286 = scmp.lt.s32.totalorder %s27, 1
          %s287 = scalar_select %p286, %s27, 1
          %s288 = smul.addr %s287, 4
          %s289 = scalar_lea.vmem %s5, %s288
        $region40: #{tpu_custom_call.1} parent=19 // pred_fallthru
          _
      $region20: #{tpu_custom_call.1} parent=5 // pred_fallthru
        _
      %p290 = scmp.le.s32.totalorder 1, %s19
      %p291 = scmp.lt.s32.totalorder %s19, 5
      %p292 = pnand %p290, %p291
      %p293 = pneg %p292
      // Predicated region
      $region41: #{tpu_custom_call.1} parent=5 // pred_check
        _
      $region42: #{tpu_custom_call.1} parent=5 // pred_check_branch
        %295 = sbr.rel (%p292) target = $region44
      $region43: #{tpu_custom_call.1} parent=5 // pred_region
        %s296 = ssub.s32 %s19, 1
        %s297 = sand.u32 %s44, 1
        %s298 = scalar_lea.sflag [#allocation4], %s297
        %s299 = sand.u32 %s44, 1
        %s300 = smul.addr %s299, 16
        %s301 = scalar_lea.vmem [#allocation3], %s300
        // Predicated region
        $region45: #{tpu_custom_call.1} parent=43 // pred_check
          %p302 = pneg %p57
        $region46: #{tpu_custom_call.1} parent=43 // pred_check_branch
          %304 = sbr.rel (%p302) target = $region48
        $region47: #{tpu_custom_call.1} parent=43 // pred_region
          %305 = dma.done %s298, 256
        $region48: #{tpu_custom_call.1} parent=43 // pred_fallthru
          _
        // Predicated region
        $region49: #{tpu_custom_call.1} parent=43 // pred_check
          %p306 = pneg %p78
        $region50: #{tpu_custom_call.1} parent=43 // pred_check_branch
          %308 = sbr.rel (%p306) target = $region52
        $region51: #{tpu_custom_call.1} parent=43 // pred_region
          %309 = dma.done [#allocation7], 128
        $region52: #{tpu_custom_call.1} parent=43 // pred_fallthru
          _
        %s310 = sand.u32 %s44, 1
        %s311 = scalar_lea.sflag [#allocation4], %s310
        %s312 = sand.u32 %s44, 1
        %s313 = smul.addr %s312, 16
        %s314 = scalar_lea.vmem [#allocation3], %s313
        %p315 = pneg %p57
        %p316 = pneg %p54
        %p317 = pneg %p78
        %p318 = pneg %p75
        %p319 = scmp.lt.s32.totalorder %s29, 1
        %s320 = scalar_select %p319, %s29, 1
        %s321 = smul.addr %s320, 8
        %s322 = smul.addr %s321, 8
        %s323 = scalar_lea.vmem %s2, %s322
        %p324 = pneg %p104
        %p325 = pneg %p101
        %p326 = scmp.lt.s32.totalorder %s29, 1
        %s327 = scalar_select %p326, %s29, 1
        %s328 = smul.addr %s327, 4
        %s329 = smul.addr %s328, 8
        %s330 = scalar_lea.vmem %s3, %s329
        %p331 = pneg %p130
        %p332 = pneg %p127
        %p333 = scmp.lt.s32.totalorder %s29, 1
        %s334 = scalar_select %p333, %s29, 1
        %s335 = smul.addr %s334, 8
        %s336 = smul.addr %s335, 8
        %s337 = scalar_lea.vmem %s4, %s336
        %p338 = pneg %p156
        %p339 = pneg %p153
        %p340 = scmp.lt.s32.totalorder %s29, 1
        %s341 = scalar_select %p340, %s29, 1
        %s342 = smul.addr %s341, 4
        %s343 = scalar_lea.vmem %s5, %s342
        %p344 = pneg %p182
        %p345 = pneg %p179
        %p346 = pneg %p208
        %p347 = pneg %p205
        %s348 = sand.u32 %s195, 1
        %s349 = scalar_lea.sflag [#allocation5], %s348
        %s350 = sand.u32 %s195, 1
        %s351 = smul.addr %s350, 2
        %s352 = scalar_lea.vmem [#allocation8], %s351
        %p353 = scmp.lt.s32.totalorder %s29, 1
        %s354 = scalar_select %p353, %s29, 1
        %s355 = smul.addr %s354, 8
        %s356 = smul.addr %s355, 8
        %s357 = scalar_lea.vmem %s2, %s356
        %p358 = scmp.lt.s32.totalorder %s29, 1
        %s359 = scalar_select %p358, %s29, 1
        %s360 = smul.addr %s359, 4
        %s361 = smul.addr %s360, 8
        %s362 = scalar_lea.vmem %s3, %s361
        %p363 = scmp.lt.s32.totalorder %s29, 1
        %s364 = scalar_select %p363, %s29, 1
        %s365 = smul.addr %s364, 8
        %s366 = smul.addr %s365, 8
        %s367 = scalar_lea.vmem %s4, %s366
        %p368 = scmp.lt.s32.totalorder %s29, 1
        %s369 = scalar_select %p368, %s29, 1
        %s370 = smul.addr %s369, 4
        %s371 = scalar_lea.vmem %s5, %s370
        %p373 = scmp.eq.s32.totalorder %s29, 0
        // Predicated region
        $region53: #{tpu_custom_call.1} parent=43 // pred_check
          %p374 = pneg %p373
        $region54: #{tpu_custom_call.1} parent=43 // pred_check_branch
          %376 = sbr.rel (%p374) target = $region56
        $region55: #{tpu_custom_call.1} parent=43 // pred_region
          %v377 = vld [vmem:[#allocation6] sm:$0xff]
          %vm378 = vcmask 261120
          %379 = vst.msk [vmem:[#allocation2] sm:$0xff] %vm378, %v377
        $region56: #{tpu_custom_call.1} parent=43 // pred_fallthru
          _
        %v380 = vld [vmem:[%s301] sm:$0xff]
        %v381 = vld [vmem:[%s301 + $0x8] sm:$0xff]
        %v382 = vld [vmem:[#allocation2] sm:$0xff]
        %v383 = vld [vmem:[%s357] sm:$0xff]
        %v384 = vld [vmem:[%s357 + $0x10] sm:$0xff]
        %v385 = vld [vmem:[%s357 + $0x20] sm:$0xff]
        %v386 = vld [vmem:[%s357 + $0x30] sm:$0xff]
        %v387 = vpack.c.bf16 %v382, %v382
        %v388 = vpack.c.bf16 %v384, %v383
        %v389 = vpack.c.bf16 %v386, %v385
        %v390 = vld [vmem:[%s371] sm:$0x1]
        %v392 = vlaneseq
        %v393 = vshrl.u32 %v392, 7
        %v394 = vsub.s32 0, %v393
        %v395 = vrot.slane %v390, %v394
        %vm397 = vcmask 261120
        %v399 = vsel %vm397, %v387, 0
        %401 = vmatprep.subr.bf16.mxu0 0
        %402 = vmatpush1.bf16.msra.mxu0 %v388
        %403 = vmatprep.subr.bf16.mxu0 0
        %404 = vmatpush1.bf16.msra.mxu0 %v389
        %405 = vmatprep.subr.bf16.mxu0 0
        %406 = vmatpush1.bf16.msra.mxu0 0
        %407 = vmatprep.subr.bf16.mxu0 0
        %408 = vmatpush1.bf16.msra.mxu0 0
        %409 = vmatprep.subr.bf16.mxu0 0
        %410 = vmatpush1.bf16.msra.mxu0 0
        %411 = vmatprep.subr.bf16.mxu0 0
        %412 = vmatpush1.bf16.msra.mxu0 0
        %413 = vmatprep.subr.bf16.mxu0 0
        %414 = vmatpush1.bf16.msra.mxu0 0
        %415 = vmatprep.subr.bf16.mxu0 0
        %416 = vmatpush1.bf16.msra.mxu0 0
        %417 = vmatprep.subr.bf16.mxu0 0
        %418 = vmatpush1.bf16.msra.mxu0 0
        %419 = vmatprep.subr.bf16.mxu0 0
        %420 = vmatpush1.bf16.msra.mxu0 0
        %421 = vmatprep.subr.bf16.mxu0 0
        %422 = vmatpush1.bf16.msra.mxu0 0
        %423 = vmatprep.subr.bf16.mxu0 0
        %424 = vmatpush1.bf16.msra.mxu0 0
        %425 = vmatprep.subr.bf16.mxu0 0
        %426 = vmatpush1.bf16.msra.mxu0 0
        %427 = vmatprep.subr.bf16.mxu0 0
        %428 = vmatpush1.bf16.msra.mxu0 0
        %429 = vmatprep.subr.bf16.mxu0 0
        %430 = vmatpush1.bf16.msra.mxu0 0
        %431 = vmatprep.subr.bf16.mxu0 0
        %432 = vmatpush1.bf16.msra.mxu0 0
        %433 = vmatprep.mubr.bf16.mxu0 0
        %434 = vmatmul.mubr.bf16.gmra.mrb[0].mxu0 %v399
        %v435 = vpop.f32.mrb[0].mxu0
        %v436 = vadd.f32 %v395, %v435
        %v437 = vpop.f32.mrb[0].mxu0
        %v438 = vpop.f32.mrb[0].mxu0
        %v439 = vpop.f32.mrb[0].mxu0
        %440 = vdwg.mxu0
        %v441 = vpack.c.bf16 %v381, %v380
        %444 = vrot.lane.b32.xlu0 %v388, 96
        %v445 = vpop.permute.xlu0 %444
        %446 = vrot.lane.b32.xlu0 %v389, 96
        %v447 = vpop.permute.xlu0 %446
        %450 = vrot.lane.b32.xlu0 %v395, 96
        %v451 = vpop.permute.xlu0 %450
        %v454 = vsel %vm397, %v441, 0
        %456 = vmatprep.subr.bf16.mxu0 0
        %457 = vmatpush1.bf16.msra.mxu0 %v445
        %458 = vmatprep.subr.bf16.mxu0 0
        %459 = vmatpush1.bf16.msra.mxu0 %v447
        %460 = vmatprep.subr.bf16.mxu0 0
        %461 = vmatpush1.bf16.msra.mxu0 0
        %462 = vmatprep.subr.bf16.mxu0 0
        %463 = vmatpush1.bf16.msra.mxu0 0
        %464 = vmatprep.subr.bf16.mxu0 0
        %465 = vmatpush1.bf16.msra.mxu0 0
        %466 = vmatprep.subr.bf16.mxu0 0
        %467 = vmatpush1.bf16.msra.mxu0 0
        %468 = vmatprep.subr.bf16.mxu0 0
        %469 = vmatpush1.bf16.msra.mxu0 0
        %470 = vmatprep.subr.bf16.mxu0 0
        %471 = vmatpush1.bf16.msra.mxu0 0
        %472 = vmatprep.subr.bf16.mxu0 0
        %473 = vmatpush1.bf16.msra.mxu0 0
        %474 = vmatprep.subr.bf16.mxu0 0
        %475 = vmatpush1.bf16.msra.mxu0 0
        %476 = vmatprep.subr.bf16.mxu0 0
        %477 = vmatpush1.bf16.msra.mxu0 0
        %478 = vmatprep.subr.bf16.mxu0 0
        %479 = vmatpush1.bf16.msra.mxu0 0
        %480 = vmatprep.subr.bf16.mxu0 0
        %481 = vmatpush1.bf16.msra.mxu0 0
        %482 = vmatprep.subr.bf16.mxu0 0
        %483 = vmatpush1.bf16.msra.mxu0 0
        %484 = vmatprep.subr.bf16.mxu0 0
        %485 = vmatpush1.bf16.msra.mxu0 0
        %486 = vmatprep.subr.bf16.mxu0 0
        %487 = vmatpush1.bf16.msra.mxu0 0
        %488 = vmatprep.mubr.bf16.mxu0 0
        %489 = vmatmul.mubr.bf16.gmra.mrb[0].mxu0 %v454
        %v490 = vpop.f32.mrb[0].mxu0
        %v491 = vadd.f32 %v451, %v490
        %v492 = vpop.f32.mrb[0].mxu0
        %v493 = vpop.f32.mrb[0].mxu0
        %v494 = vadd.f32 %v451, %v493
        %v495 = vpop.f32.mrb[0].mxu0
        %496 = vdwg.mxu0
        %498 = vrot.lane.b32.xlu0 %v436, 120
        %v499 = vpop.permute.xlu0 %498
        %501 = vrot.lane.b32.xlu0 %v436, 112
        %v502 = vpop.permute.xlu0 %501
        %504 = vrot.lane.b32.xlu0 %v436, 104
        %v505 = vpop.permute.xlu0 %504
        %v507 = vpack.c.bf16 %v436, %v436
        %v508 = vpack.c.bf16 %v499, %v499
        %v509 = vpack.c.bf16 %v502, %v502
        %v510 = vpack.c.bf16 %v505, %v505
        %513 = vrot.lane.b32.xlu0 %v491, 120
        %v514 = vpop.permute.xlu0 %513
        %515 = vrot.lane.b32.xlu0 %v494, 120
        %v516 = vpop.permute.xlu0 %515
        %519 = vrot.lane.b32.xlu0 %v491, 112
        %v520 = vpop.permute.xlu0 %519
        %521 = vrot.lane.b32.xlu0 %v494, 112
        %v522 = vpop.permute.xlu0 %521
        %525 = vrot.lane.b32.xlu0 %v491, 104
        %v526 = vpop.permute.xlu0 %525
        %527 = vrot.lane.b32.xlu0 %v494, 104
        %v528 = vpop.permute.xlu0 %527
        %v531 = vpack.c.bf16 %v494, %v491
        %v532 = vpack.c.bf16 %v516, %v514
        %v533 = vpack.c.bf16 %v522, %v520
        %v534 = vpack.c.bf16 %v528, %v526
        %vm535 = vcmask 64512
        %v537 = vsel %vm535, %v507, 0
        %v540 = vsel %vm535, %v531, 0
        %542 = vmatprep.subr.bf16.mxu0 0
        %543 = vmatpush1.bf16.xpose.msra.mxu0 %v540
        %544 = vmatprep.subr.bf16.mxu0 0
        %545 = vmatpush1.bf16.xpose.msra.mxu0 0
        %546 = vmatprep.subr.bf16.mxu0 0
        %547 = vmatpush1.bf16.xpose.msra.mxu0 0
        %548 = vmatprep.subr.bf16.mxu0 0
        %549 = vmatpush1.bf16.xpose.msra.mxu0 0
        %550 = vmatprep.subr.bf16.mxu0 0
        %551 = vmatpush1.bf16.xpose.msra.mxu0 0
        %552 = vmatprep.subr.bf16.mxu0 0
        %553 = vmatpush1.bf16.xpose.msra.mxu0 0
        %554 = vmatprep.subr.bf16.mxu0 0
        %555 = vmatpush1.bf16.xpose.msra.mxu0 0
        %556 = vmatprep.subr.bf16.mxu0 0
        %557 = vmatpush1.bf16.xpose.msra.mxu0 0
        %558 = vmatprep.subr.bf16.mxu0 0
        %559 = vmatpush1.bf16.xpose.msra.mxu0 0
        %560 = vmatprep.subr.bf16.mxu0 0
        %561 = vmatpush1.bf16.xpose.msra.mxu0 0
        %562 = vmatprep.subr.bf16.mxu0 0
        %563 = vmatpush1.bf16.xpose.msra.mxu0 0
        %564 = vmatprep.subr.bf16.mxu0 0
        %565 = vmatpush1.bf16.xpose.msra.mxu0 0
        %566 = vmatprep.subr.bf16.mxu0 0
        %567 = vmatpush1.bf16.xpose.msra.mxu0 0
        %568 = vmatprep.subr.bf16.mxu0 0
        %569 = vmatpush1.bf16.xpose.msra.mxu0 0
        %570 = vmatprep.subr.bf16.mxu0 0
        %571 = vmatpush1.bf16.xpose.msra.mxu0 0
        %572 = vmatprep.subr.bf16.mxu0 0
        %573 = vmatpush1.bf16.xpose.msra.mxu0 0
        %574 = vmatprep.mubr.bf16.mxu0 0
        %575 = vmatmul.mubr.bf16.gmra.mrb[0].mxu0 %v537
        %v576 = vpop.f32.mrb[0].mxu0
        %v577 = vadd.f32 0.0, %v576
        %v578 = vpop.f32.mrb[0].mxu0
        %v579 = vpop.f32.mrb[0].mxu0
        %v580 = vpop.f32.mrb[0].mxu0
        %581 = vdwg.mxu0
        %v583 = vsel %vm535, %v508, 0
        %v586 = vsel %vm535, %v532, 0
        %588 = vmatprep.subr.bf16.mxu0 0
        %589 = vmatpush1.bf16.xpose.msra.mxu0 %v586
        %590 = vmatprep.subr.bf16.mxu0 0
        %591 = vmatpush1.bf16.xpose.msra.mxu0 0
        %592 = vmatprep.subr.bf16.mxu0 0
        %593 = vmatpush1.bf16.xpose.msra.mxu0 0
        %594 = vmatprep.subr.bf16.mxu0 0
        %595 = vmatpush1.bf16.xpose.msra.mxu0 0
        %596 = vmatprep.subr.bf16.mxu0 0
        %597 = vmatpush1.bf16.xpose.msra.mxu0 0
        %598 = vmatprep.subr.bf16.mxu0 0
        %599 = vmatpush1.bf16.xpose.msra.mxu0 0
        %600 = vmatprep.subr.bf16.mxu0 0
        %601 = vmatpush1.bf16.xpose.msra.mxu0 0
        %602 = vmatprep.subr.bf16.mxu0 0
        %603 = vmatpush1.bf16.xpose.msra.mxu0 0
        %604 = vmatprep.subr.bf16.mxu0 0
        %605 = vmatpush1.bf16.xpose.msra.mxu0 0
        %606 = vmatprep.subr.bf16.mxu0 0
        %607 = vmatpush1.bf16.xpose.msra.mxu0 0
        %608 = vmatprep.subr.bf16.mxu0 0
        %609 = vmatpush1.bf16.xpose.msra.mxu0 0
        %610 = vmatprep.subr.bf16.mxu0 0
        %611 = vmatpush1.bf16.xpose.msra.mxu0 0
        %612 = vmatprep.subr.bf16.mxu0 0
        %613 = vmatpush1.bf16.xpose.msra.mxu0 0
        %614 = vmatprep.subr.bf16.mxu0 0
        %615 = vmatpush1.bf16.xpose.msra.mxu0 0
        %616 = vmatprep.subr.bf16.mxu0 0
        %617 = vmatpush1.bf16.xpose.msra.mxu0 0
        %618 = vmatprep.subr.bf16.mxu0 0
        %619 = vmatpush1.bf16.xpose.msra.mxu0 0
        %620 = vmatprep.mubr.bf16.mxu0 0
        %621 = vmatmul.mubr.bf16.gmra.mrb[0].mxu0 %v583
        %v622 = vpop.f32.mrb[0].mxu0
        %v623 = vadd.f32 0.0, %v622
        %v624 = vpop.f32.mrb[0].mxu0
        %v625 = vpop.f32.mrb[0].mxu0
        %v626 = vpop.f32.mrb[0].mxu0
        %627 = vdwg.mxu0
        %v629 = vsel %vm535, %v509, 0
        %v632 = vsel %vm535, %v533, 0
        %634 = vmatprep.subr.bf16.mxu0 0
        %635 = vmatpush1.bf16.xpose.msra.mxu0 %v632
        %636 = vmatprep.subr.bf16.mxu0 0
        %637 = vmatpush1.bf16.xpose.msra.mxu0 0
        %638 = vmatprep.subr.bf16.mxu0 0
        %639 = vmatpush1.bf16.xpose.msra.mxu0 0
        %640 = vmatprep.subr.bf16.mxu0 0
        %641 = vmatpush1.bf16.xpose.msra.mxu0 0
        %642 = vmatprep.subr.bf16.mxu0 0
        %643 = vmatpush1.bf16.xpose.msra.mxu0 0
        %644 = vmatprep.subr.bf16.mxu0 0
        %645 = vmatpush1.bf16.xpose.msra.mxu0 0
        %646 = vmatprep.subr.bf16.mxu0 0
        %647 = vmatpush1.bf16.xpose.msra.mxu0 0
        %648 = vmatprep.subr.bf16.mxu0 0
        %649 = vmatpush1.bf16.xpose.msra.mxu0 0
        %650 = vmatprep.subr.bf16.mxu0 0
        %651 = vmatpush1.bf16.xpose.msra.mxu0 0
        %652 = vmatprep.subr.bf16.mxu0 0
        %653 = vmatpush1.bf16.xpose.msra.mxu0 0
        %654 = vmatprep.subr.bf16.mxu0 0
        %655 = vmatpush1.bf16.xpose.msra.mxu0 0
        %656 = vmatprep.subr.bf16.mxu0 0
        %657 = vmatpush1.bf16.xpose.msra.mxu0 0
        %658 = vmatprep.subr.bf16.mxu0 0
        %659 = vmatpush1.bf16.xpose.msra.mxu0 0
        %660 = vmatprep.subr.bf16.mxu0 0
        %661 = vmatpush1.bf16.xpose.msra.mxu0 0
        %662 = vmatprep.subr.bf16.mxu0 0
        %663 = vmatpush1.bf16.xpose.msra.mxu0 0
        %664 = vmatprep.subr.bf16.mxu0 0
        %665 = vmatpush1.bf16.xpose.msra.mxu0 0
        %666 = vmatprep.mubr.bf16.mxu0 0
        %667 = vmatmul.mubr.bf16.gmra.mrb[0].mxu0 %v629
        %v668 = vpop.f32.mrb[0].mxu0
        %v669 = vadd.f32 0.0, %v668
        %v670 = vpop.f32.mrb[0].mxu0
        %v671 = vpop.f32.mrb[0].mxu0
        %v672 = vpop.f32.mrb[0].mxu0
        %673 = vdwg.mxu0
        %v675 = vsel %vm535, %v510, 0
        %v678 = vsel %vm535, %v534, 0
        %680 = vmatprep.subr.bf16.mxu0 0
        %681 = vmatpush1.bf16.xpose.msra.mxu0 %v678
        %682 = vmatprep.subr.bf16.mxu0 0
        %683 = vmatpush1.bf16.xpose.msra.mxu0 0
        %684 = vmatprep.subr.bf16.mxu0 0
        %685 = vmatpush1.bf16.xpose.msra.mxu0 0
        %686 = vmatprep.subr.bf16.mxu0 0
        %687 = vmatpush1.bf16.xpose.msra.mxu0 0
        %688 = vmatprep.subr.bf16.mxu0 0
        %689 = vmatpush1.bf16.xpose.msra.mxu0 0
        %690 = vmatprep.subr.bf16.mxu0 0
        %691 = vmatpush1.bf16.xpose.msra.mxu0 0
        %692 = vmatprep.subr.bf16.mxu0 0
        %693 = vmatpush1.bf16.xpose.msra.mxu0 0
        %694 = vmatprep.subr.bf16.mxu0 0
        %695 = vmatpush1.bf16.xpose.msra.mxu0 0
        %696 = vmatprep.subr.bf16.mxu0 0
        %697 = vmatpush1.bf16.xpose.msra.mxu0 0
        %698 = vmatprep.subr.bf16.mxu0 0
        %699 = vmatpush1.bf16.xpose.msra.mxu0 0
        %700 = vmatprep.subr.bf16.mxu0 0
        %701 = vmatpush1.bf16.xpose.msra.mxu0 0
        %702 = vmatprep.subr.bf16.mxu0 0
        %703 = vmatpush1.bf16.xpose.msra.mxu0 0
        %704 = vmatprep.subr.bf16.mxu0 0
        %705 = vmatpush1.bf16.xpose.msra.mxu0 0
        %706 = vmatprep.subr.bf16.mxu0 0
        %707 = vmatpush1.bf16.xpose.msra.mxu0 0
        %708 = vmatprep.subr.bf16.mxu0 0
        %709 = vmatpush1.bf16.xpose.msra.mxu0 0
        %710 = vmatprep.subr.bf16.mxu0 0
        %711 = vmatpush1.bf16.xpose.msra.mxu0 0
        %712 = vmatprep.mubr.bf16.mxu0 0
        %713 = vmatmul.mubr.bf16.gmra.mrb[0].mxu0 %v675
        %v714 = vpop.f32.mrb[0].mxu0
        %v715 = vadd.f32 0.0, %v714
        %v716 = vpop.f32.mrb[0].mxu0
        %v717 = vpop.f32.mrb[0].mxu0
        %v718 = vpop.f32.mrb[0].mxu0
        %719 = vdwg.mxu0
        %vm720 = vcmask 130048
        %v721 = vsel %vm720, %v577, -inf
        %722 = vmax.xlane.f32.xlu0 %v721
        %v723 = vpop.xlane.xlu0 %722
        %v724 = vsel %vm720, %v623, -inf
        %725 = vmax.xlane.f32.xlu0 %v724
        %v726 = vpop.xlane.xlu0 %725
        %v727 = vsel %vm720, %v669, -inf
        %728 = vmax.xlane.f32.xlu0 %v727
        %v729 = vpop.xlane.xlu0 %728
        %v730 = vsel %vm720, %v715, -inf
        %731 = vmax.xlane.f32.xlu0 %v730
        %v732 = vpop.xlane.xlu0 %731
        %v733 = vsub.f32 %v577, %v723
        %v734 = vsub.f32 %v623, %v726
        %v735 = vsub.f32 %v669, %v729
        %v736 = vsub.f32 %v715, %v732
        %v737 = vmul.f32 %v733, 1.442695
        %v738 = vpow.pop %v737
        %v739 = vmul.f32 %v734, 1.442695
        %v740 = vpow.pop %v739
        %v741 = vmul.f32 %v735, 1.442695
        %v742 = vpow.pop %v741
        %v743 = vmul.f32 %v736, 1.442695
        %v744 = vpow.pop %v743
        %v745 = vsel %vm720, %v738, 0.0
        %746 = vadd.xlane.f32.xlu0 %v745
        %v747 = vpop.xlane.xlu0 %746
        %v748 = vsel %vm720, %v740, 0.0
        %749 = vadd.xlane.f32.xlu0 %v748
        %v750 = vpop.xlane.xlu0 %749
        %v751 = vsel %vm720, %v742, 0.0
        %752 = vadd.xlane.f32.xlu0 %v751
        %v753 = vpop.xlane.xlu0 %752
        %v754 = vsel %vm720, %v744, 0.0
        %755 = vadd.xlane.f32.xlu0 %v754
        %v756 = vpop.xlane.xlu0 %755
        %v757 = vrcp.pop %v747
        %v758 = vrcp.pop %v750
        %v759 = vrcp.pop %v753
        %v760 = vrcp.pop %v756
        %v761 = vmul.f32 %v738, %v757
        %v762 = vmul.f32 %v740, %v758
        %v763 = vmul.f32 %v742, %v759
        %v764 = vmul.f32 %v744, %v760
        %v765 = vpack.c.bf16 %v761, %v761
        %v766 = vpack.c.bf16 %v762, %v762
        %v767 = vpack.c.bf16 %v763, %v763
        %v768 = vpack.c.bf16 %v764, %v764
        %770 = vrot.lane.b32.xlu0 %v531, 96
        %v771 = vpop.permute.xlu0 %770
        %v774 = vsel %vm720, %v765, 0
        %776 = vmatprep.subr.bf16.mxu0 0
        %777 = vmatpush1.bf16.msra.mxu0 %v771
        %778 = vmatprep.subr.bf16.mxu0 0
        %779 = vmatpush1.bf16.msra.mxu0 0
        %780 = vmatprep.subr.bf16.mxu0 0
        %781 = vmatpush1.bf16.msra.mxu0 0
        %782 = vmatprep.subr.bf16.mxu0 0
        %783 = vmatpush1.bf16.msra.mxu0 0
        %784 = vmatprep.subr.bf16.mxu0 0
        %785 = vmatpush1.bf16.msra.mxu0 0
        %786 = vmatprep.subr.bf16.mxu0 0
        %787 = vmatpush1.bf16.msra.mxu0 0
        %788 = vmatprep.subr.bf16.mxu0 0
        %789 = vmatpush1.bf16.msra.mxu0 0
        %790 = vmatprep.subr.bf16.mxu0 0
        %791 = vmatpush1.bf16.msra.mxu0 0
        %792 = vmatprep.subr.bf16.mxu0 0
        %793 = vmatpush1.bf16.msra.mxu0 0
        %794 = vmatprep.subr.bf16.mxu0 0
        %795 = vmatpush1.bf16.msra.mxu0 0
        %796 = vmatprep.subr.bf16.mxu0 0
        %797 = vmatpush1.bf16.msra.mxu0 0
        %798 = vmatprep.subr.bf16.mxu0 0
        %799 = vmatpush1.bf16.msra.mxu0 0
        %800 = vmatprep.subr.bf16.mxu0 0
        %801 = vmatpush1.bf16.msra.mxu0 0
        %802 = vmatprep.subr.bf16.mxu0 0
        %803 = vmatpush1.bf16.msra.mxu0 0
        %804 = vmatprep.subr.bf16.mxu0 0
        %805 = vmatpush1.bf16.msra.mxu0 0
        %806 = vmatprep.subr.bf16.mxu0 0
        %807 = vmatpush1.bf16.msra.mxu0 0
        %808 = vmatprep.mubr.bf16.mxu0 0
        %809 = vmatmul.mubr.bf16.gmra.mrb[0].mxu0 %v774
        %v810 = vpop.f32.mrb[0].mxu0
        %v811 = vadd.f32 0.0, %v810
        %v812 = vpop.f32.mrb[0].mxu0
        %v813 = vpop.f32.mrb[0].mxu0
        %v814 = vpop.f32.mrb[0].mxu0
        %815 = vdwg.mxu0
        %817 = vrot.lane.b32.xlu0 %v532, 96
        %v818 = vpop.permute.xlu0 %817
        %v821 = vsel %vm720, %v766, 0
        %823 = vmatprep.subr.bf16.mxu0 0
        %824 = vmatpush1.bf16.msra.mxu0 %v818
        %825 = vmatprep.subr.bf16.mxu0 0
        %826 = vmatpush1.bf16.msra.mxu0 0
        %827 = vmatprep.subr.bf16.mxu0 0
        %828 = vmatpush1.bf16.msra.mxu0 0
        %829 = vmatprep.subr.bf16.mxu0 0
        %830 = vmatpush1.bf16.msra.mxu0 0
        %831 = vmatprep.subr.bf16.mxu0 0
        %832 = vmatpush1.bf16.msra.mxu0 0
        %833 = vmatprep.subr.bf16.mxu0 0
        %834 = vmatpush1.bf16.msra.mxu0 0
        %835 = vmatprep.subr.bf16.mxu0 0
        %836 = vmatpush1.bf16.msra.mxu0 0
        %837 = vmatprep.subr.bf16.mxu0 0
        %838 = vmatpush1.bf16.msra.mxu0 0
        %839 = vmatprep.subr.bf16.mxu0 0
        %840 = vmatpush1.bf16.msra.mxu0 0
        %841 = vmatprep.subr.bf16.mxu0 0
        %842 = vmatpush1.bf16.msra.mxu0 0
        %843 = vmatprep.subr.bf16.mxu0 0
        %844 = vmatpush1.bf16.msra.mxu0 0
        %845 = vmatprep.subr.bf16.mxu0 0
        %846 = vmatpush1.bf16.msra.mxu0 0
        %847 = vmatprep.subr.bf16.mxu0 0
        %848 = vmatpush1.bf16.msra.mxu0 0
        %849 = vmatprep.subr.bf16.mxu0 0
        %850 = vmatpush1.bf16.msra.mxu0 0
        %851 = vmatprep.subr.bf16.mxu0 0
        %852 = vmatpush1.bf16.msra.mxu0 0
        %853 = vmatprep.subr.bf16.mxu0 0
        %854 = vmatpush1.bf16.msra.mxu0 0
        %855 = vmatprep.mubr.bf16.mxu0 0
        %856 = vmatmul.mubr.bf16.gmra.mrb[0].mxu0 %v821
        %v857 = vpop.f32.mrb[0].mxu0
        %v858 = vadd.f32 0.0, %v857
        %v859 = vpop.f32.mrb[0].mxu0
        %v860 = vpop.f32.mrb[0].mxu0
        %v861 = vpop.f32.mrb[0].mxu0
        %862 = vdwg.mxu0
        %864 = vrot.lane.b32.xlu0 %v533, 96
        %v865 = vpop.permute.xlu0 %864
        %v868 = vsel %vm720, %v767, 0
        %870 = vmatprep.subr.bf16.mxu0 0
        %871 = vmatpush1.bf16.msra.mxu0 %v865
        %872 = vmatprep.subr.bf16.mxu0 0
        %873 = vmatpush1.bf16.msra.mxu0 0
        %874 = vmatprep.subr.bf16.mxu0 0
        %875 = vmatpush1.bf16.msra.mxu0 0
        %876 = vmatprep.subr.bf16.mxu0 0
        %877 = vmatpush1.bf16.msra.mxu0 0
        %878 = vmatprep.subr.bf16.mxu0 0
        %879 = vmatpush1.bf16.msra.mxu0 0
        %880 = vmatprep.subr.bf16.mxu0 0
        %881 = vmatpush1.bf16.msra.mxu0 0
        %882 = vmatprep.subr.bf16.mxu0 0
        %883 = vmatpush1.bf16.msra.mxu0 0
        %884 = vmatprep.subr.bf16.mxu0 0
        %885 = vmatpush1.bf16.msra.mxu0 0
        %886 = vmatprep.subr.bf16.mxu0 0
        %887 = vmatpush1.bf16.msra.mxu0 0
        %888 = vmatprep.subr.bf16.mxu0 0
        %889 = vmatpush1.bf16.msra.mxu0 0
        %890 = vmatprep.subr.bf16.mxu0 0
        %891 = vmatpush1.bf16.msra.mxu0 0
        %892 = vmatprep.subr.bf16.mxu0 0
        %893 = vmatpush1.bf16.msra.mxu0 0
        %894 = vmatprep.subr.bf16.mxu0 0
        %895 = vmatpush1.bf16.msra.mxu0 0
        %896 = vmatprep.subr.bf16.mxu0 0
        %897 = vmatpush1.bf16.msra.mxu0 0
        %898 = vmatprep.subr.bf16.mxu0 0
        %899 = vmatpush1.bf16.msra.mxu0 0
        %900 = vmatprep.subr.bf16.mxu0 0
        %901 = vmatpush1.bf16.msra.mxu0 0
        %902 = vmatprep.mubr.bf16.mxu0 0
        %903 = vmatmul.mubr.bf16.gmra.mrb[0].mxu0 %v868
        %v904 = vpop.f32.mrb[0].mxu0
        %v905 = vadd.f32 0.0, %v904
        %v906 = vpop.f32.mrb[0].mxu0
        %v907 = vpop.f32.mrb[0].mxu0
        %v908 = vpop.f32.mrb[0].mxu0
        %909 = vdwg.mxu0
        %911 = vrot.lane.b32.xlu0 %v534, 96
        %v912 = vpop.permute.xlu0 %911
        %v915 = vsel %vm720, %v768, 0
        %917 = vmatprep.subr.bf16.mxu0 0
        %918 = vmatpush1.bf16.msra.mxu0 %v912
        %919 = vmatprep.subr.bf16.mxu0 0
        %920 = vmatpush1.bf16.msra.mxu0 0
        %921 = vmatprep.subr.bf16.mxu0 0
        %922 = vmatpush1.bf16.msra.mxu0 0
        %923 = vmatprep.subr.bf16.mxu0 0
        %924 = vmatpush1.bf16.msra.mxu0 0
        %925 = vmatprep.subr.bf16.mxu0 0
        %926 = vmatpush1.bf16.msra.mxu0 0
        %927 = vmatprep.subr.bf16.mxu0 0
        %928 = vmatpush1.bf16.msra.mxu0 0
        %929 = vmatprep.subr.bf16.mxu0 0
        %930 = vmatpush1.bf16.msra.mxu0 0
        %931 = vmatprep.subr.bf16.mxu0 0
        %932 = vmatpush1.bf16.msra.mxu0 0
        %933 = vmatprep.subr.bf16.mxu0 0
        %934 = vmatpush1.bf16.msra.mxu0 0
        %935 = vmatprep.subr.bf16.mxu0 0
        %936 = vmatpush1.bf16.msra.mxu0 0
        %937 = vmatprep.subr.bf16.mxu0 0
        %938 = vmatpush1.bf16.msra.mxu0 0
        %939 = vmatprep.subr.bf16.mxu0 0
        %940 = vmatpush1.bf16.msra.mxu0 0
        %941 = vmatprep.subr.bf16.mxu0 0
        %942 = vmatpush1.bf16.msra.mxu0 0
        %943 = vmatprep.subr.bf16.mxu0 0
        %944 = vmatpush1.bf16.msra.mxu0 0
        %945 = vmatprep.subr.bf16.mxu0 0
        %946 = vmatpush1.bf16.msra.mxu0 0
        %947 = vmatprep.subr.bf16.mxu0 0
        %948 = vmatpush1.bf16.msra.mxu0 0
        %949 = vmatprep.mubr.bf16.mxu0 0
        %950 = vmatmul.mubr.bf16.gmra.mrb[0].mxu0 %v915
        %v951 = vpop.f32.mrb[0].mxu0
        %v952 = vadd.f32 0.0, %v951
        %v953 = vpop.f32.mrb[0].mxu0
        %v954 = vpop.f32.mrb[0].mxu0
        %v955 = vpop.f32.mrb[0].mxu0
        %956 = vdwg.mxu0
        %958 = vrot.lane.b32.xlu0 %v858, 8
        %v959 = vpop.permute.xlu0 %958
        %962 = vrot.lane.b32.xlu0 %v905, 16
        %v963 = vpop.permute.xlu0 %962
        %966 = vrot.lane.b32.xlu0 %v952, 24
        %v967 = vpop.permute.xlu0 %966
        %v969 = vsel %vm535, %v811, %v959
        %v970 = vsel %vm720, %v969, %v963
        %vm971 = vcmask 195584
        %v972 = vsel %vm971, %v970, %v967
        %v973 = vld [vmem:[%s362] sm:$0xff]
        %v974 = vld [vmem:[%s362 + $0x8] sm:$0xff]
        %v975 = vld [vmem:[%s362 + $0x10] sm:$0xff]
        %v976 = vld [vmem:[%s362 + $0x18] sm:$0xff]
        %v977 = vpack.c.bf16 %v972, %v972
        %v978 = vpack.c.bf16 %v974, %v973
        %v979 = vpack.c.bf16 %v976, %v975
        %v980 = vld [vmem:[%s371] sm:$0x1]
        %v982 = vlaneseq
        %v983 = vshrl.u32 %v982, 7
        %v984 = vsub.s32 0, %v983
        %v985 = vrot.slane %v980, %v984
        %986 = vrot.lane.b32.xlu0 %v985, 32
        %v987 = vpop.permute.xlu0 %986
        %v990 = vsel %vm397, %v977, 0
        %992 = vmatprep.subr.bf16.mxu0 0
        %993 = vmatpush1.bf16.msra.mxu0 %v978
        %994 = vmatprep.subr.bf16.mxu0 0
        %995 = vmatpush1.bf16.msra.mxu0 %v979
        %996 = vmatprep.subr.bf16.mxu0 0
        %997 = vmatpush1.bf16.msra.mxu0 0
        %998 = vmatprep.subr.bf16.mxu0 0
        %999 = vmatpush1.bf16.msra.mxu0 0
        %1000 = vmatprep.subr.bf16.mxu0 0
        %1001 = vmatpush1.bf16.msra.mxu0 0
        %1002 = vmatprep.subr.bf16.mxu0 0
        %1003 = vmatpush1.bf16.msra.mxu0 0
        %1004 = vmatprep.subr.bf16.mxu0 0
        %1005 = vmatpush1.bf16.msra.mxu0 0
        %1006 = vmatprep.subr.bf16.mxu0 0
        %1007 = vmatpush1.bf16.msra.mxu0 0
        %1008 = vmatprep.subr.bf16.mxu0 0
        %1009 = vmatpush1.bf16.msra.mxu0 0
        %1010 = vmatprep.subr.bf16.mxu0 0
        %1011 = vmatpush1.bf16.msra.mxu0 0
        %1012 = vmatprep.subr.bf16.mxu0 0
        %1013 = vmatpush1.bf16.msra.mxu0 0
        %1014 = vmatprep.subr.bf16.mxu0 0
        %1015 = vmatpush1.bf16.msra.mxu0 0
        %1016 = vmatprep.subr.bf16.mxu0 0
        %1017 = vmatpush1.bf16.msra.mxu0 0
        %1018 = vmatprep.subr.bf16.mxu0 0
        %1019 = vmatpush1.bf16.msra.mxu0 0
        %1020 = vmatprep.subr.bf16.mxu0 0
        %1021 = vmatpush1.bf16.msra.mxu0 0
        %1022 = vmatprep.subr.bf16.mxu0 0
        %1023 = vmatpush1.bf16.msra.mxu0 0
        %1024 = vmatprep.mubr.bf16.mxu0 0
        %1025 = vmatmul.mubr.bf16.gmra.mrb[0].mxu0 %v990
        %v1026 = vpop.f32.mrb[0].mxu0
        %v1027 = vadd.f32 %v987, %v1026
        %v1028 = vpop.f32.mrb[0].mxu0
        %v1029 = vpop.f32.mrb[0].mxu0
        %v1030 = vpop.f32.mrb[0].mxu0
        %1031 = vdwg.mxu0
        %v1032 = vld [vmem:[%s357] sm:$0xff]
        %v1033 = vld [vmem:[%s357 + $0x8] sm:$0xff]
        %v1034 = vld [vmem:[%s357 + $0x10] sm:$0xff]
        %v1035 = vld [vmem:[%s357 + $0x18] sm:$0xff]
        %v1036 = vld [vmem:[%s357 + $0x20] sm:$0xff]
        %v1037 = vld [vmem:[%s357 + $0x28] sm:$0xff]
        %v1038 = vld [vmem:[%s357 + $0x30] sm:$0xff]
        %v1039 = vld [vmem:[%s357 + $0x38] sm:$0xff]
        %v1040 = vpack.c.bf16 %v1027, %v1027
        %v1041 = vpack.c.bf16 %v1034, %v1032
        %v1042 = vpack.c.bf16 %v1035, %v1033
        %v1043 = vpack.c.bf16 %v1038, %v1036
        %v1044 = vpack.c.bf16 %v1039, %v1037
        %v1045 = vld [vmem:[%s371 + $0x1] sm:$0x1]
        %v1047 = vlaneseq
        %v1048 = vshrl.u32 %v1047, 7
        %v1049 = vsub.s32 0, %v1048
        %v1050 = vrot.slane %v1045, %v1049
        %1056 = vrot.lane.b32.xlu0 %v1041, 32
        %v1057 = vpop.permute.xlu0 %1056
        %1058 = vrot.lane.b32.xlu0 %v1042, 32
        %v1059 = vpop.permute.xlu0 %1058
        %1060 = vrot.lane.b32.xlu0 %v1043, 32
        %v1061 = vpop.permute.xlu0 %1060
        %1062 = vrot.lane.b32.xlu0 %v1044, 32
        %v1063 = vpop.permute.xlu0 %1062
        %vm1064 = vcmask 261120
        %v1065 = vsel %vm1064, %v1057, %v1059
        %v1066 = vsel %vm1064, %v1061, %v1063
        %v1070 = vsel %vm397, %v1040, 0
        %1072 = vmatprep.subr.bf16.mxu0 0
        %1073 = vmatpush1.bf16.msra.mxu0 %v1065
        %1074 = vmatprep.subr.bf16.mxu0 0
        %1075 = vmatpush1.bf16.msra.mxu0 %v1066
        %1076 = vmatprep.subr.bf16.mxu0 0
        %1077 = vmatpush1.bf16.msra.mxu0 0
        %1078 = vmatprep.subr.bf16.mxu0 0
        %1079 = vmatpush1.bf16.msra.mxu0 0
        %1080 = vmatprep.subr.bf16.mxu0 0
        %1081 = vmatpush1.bf16.msra.mxu0 0
        %1082 = vmatprep.subr.bf16.mxu0 0
        %1083 = vmatpush1.bf16.msra.mxu0 0
        %1084 = vmatprep.subr.bf16.mxu0 0
        %1085 = vmatpush1.bf16.msra.mxu0 0
        %1086 = vmatprep.subr.bf16.mxu0 0
        %1087 = vmatpush1.bf16.msra.mxu0 0
        %1088 = vmatprep.subr.bf16.mxu0 0
        %1089 = vmatpush1.bf16.msra.mxu0 0
        %1090 = vmatprep.subr.bf16.mxu0 0
        %1091 = vmatpush1.bf16.msra.mxu0 0
        %1092 = vmatprep.subr.bf16.mxu0 0
        %1093 = vmatpush1.bf16.msra.mxu0 0
        %1094 = vmatprep.subr.bf16.mxu0 0
        %1095 = vmatpush1.bf16.msra.mxu0 0
        %1096 = vmatprep.subr.bf16.mxu0 0
        %1097 = vmatpush1.bf16.msra.mxu0 0
        %1098 = vmatprep.subr.bf16.mxu0 0
        %1099 = vmatpush1.bf16.msra.mxu0 0
        %1100 = vmatprep.subr.bf16.mxu0 0
        %1101 = vmatpush1.bf16.msra.mxu0 0
        %1102 = vmatprep.subr.bf16.mxu0 0
        %1103 = vmatpush1.bf16.msra.mxu0 0
        %1104 = vmatprep.mubr.bf16.mxu0 0
        %1105 = vmatmul.mubr.bf16.gmra.mrb[0].mxu0 %v1070
        %v1106 = vpop.f32.mrb[0].mxu0
        %v1107 = vadd.f32 %v1050, %v1106
        %v1108 = vpop.f32.mrb[0].mxu0
        %v1109 = vpop.f32.mrb[0].mxu0
        %v1110 = vpop.f32.mrb[0].mxu0
        %1111 = vdwg.mxu0
        %1113 = vrot.lane.b32.xlu0 %v1107, 120
        %v1114 = vpop.permute.xlu0 %1113
        %1116 = vrot.lane.b32.xlu0 %v1107, 112
        %v1117 = vpop.permute.xlu0 %1116
        %1119 = vrot.lane.b32.xlu0 %v1107, 104
        %v1120 = vpop.permute.xlu0 %1119
        %v1122 = vpack.c.bf16 %v1107, %v1107
        %v1123 = vpack.c.bf16 %v1114, %v1114
        %v1124 = vpack.c.bf16 %v1117, %v1117
        %v1125 = vpack.c.bf16 %v1120, %v1120
        %1127 = vrot.lane.b32.xlu0 %v1122, 96
        %v1128 = vpop.permute.xlu0 %1127
        %v1130 = vsel %vm535, %v1122, 0
        %v1133 = vsel %vm535, %v1128, 0
        %1135 = vmatprep.subr.bf16.mxu0 0
        %1136 = vmatpush1.bf16.xpose.msra.mxu0 %v1133
        %1137 = vmatprep.subr.bf16.mxu0 0
        %1138 = vmatpush1.bf16.xpose.msra.mxu0 0
        %1139 = vmatprep.subr.bf16.mxu0 0
        %1140 = vmatpush1.bf16.xpose.msra.mxu0 0
        %1141 = vmatprep.subr.bf16.mxu0 0
        %1142 = vmatpush1.bf16.xpose.msra.mxu0 0
        %1143 = vmatprep.subr.bf16.mxu0 0
        %1144 = vmatpush1.bf16.xpose.msra.mxu0 0
        %1145 = vmatprep.subr.bf16.mxu0 0
        %1146 = vmatpush1.bf16.xpose.msra.mxu0 0
        %1147 = vmatprep.subr.bf16.mxu0 0
        %1148 = vmatpush1.bf16.xpose.msra.mxu0 0
        %1149 = vmatprep.subr.bf16.mxu0 0
        %1150 = vmatpush1.bf16.xpose.msra.mxu0 0
        %1151 = vmatprep.subr.bf16.mxu0 0
        %1152 = vmatpush1.bf16.xpose.msra.mxu0 0
        %1153 = vmatprep.subr.bf16.mxu0 0
        %1154 = vmatpush1.bf16.xpose.msra.mxu0 0
        %1155 = vmatprep.subr.bf16.mxu0 0
        %1156 = vmatpush1.bf16.xpose.msra.mxu0 0
        %1157 = vmatprep.subr.bf16.mxu0 0
        %1158 = vmatpush1.bf16.xpose.msra.mxu0 0
        %1159 = vmatprep.subr.bf16.mxu0 0
        %1160 = vmatpush1.bf16.xpose.msra.mxu0 0
        %1161 = vmatprep.subr.bf16.mxu0 0
        %1162 = vmatpush1.bf16.xpose.msra.mxu0 0
        %1163 = vmatprep.subr.bf16.mxu0 0
        %1164 = vmatpush1.bf16.xpose.msra.mxu0 0
        %1165 = vmatprep.subr.bf16.mxu0 0
        %1166 = vmatpush1.bf16.xpose.msra.mxu0 0
        %1167 = vmatprep.mubr.bf16.mxu0 0
        %1168 = vmatmul.mubr.bf16.gmra.mrb[0].mxu0 %v1130
        %v1169 = vpop.f32.mrb[0].mxu0
        %v1170 = vadd.f32 0.0, %v1169
        %v1171 = vpop.f32.mrb[0].mxu0
        %v1172 = vpop.f32.mrb[0].mxu0
        %v1173 = vpop.f32.mrb[0].mxu0
        %1174 = vdwg.mxu0
        %1176 = vrot.lane.b32.xlu0 %v1123, 96
        %v1177 = vpop.permute.xlu0 %1176
        %v1179 = vsel %vm535, %v1123, 0
        %v1182 = vsel %vm535, %v1177, 0
        %1184 = vmatprep.subr.bf16.mxu0 0
        %1185 = vmatpush1.bf16.xpose.msra.mxu0 %v1182
        %1186 = vmatprep.subr.bf16.mxu0 0
        %1187 = vmatpush1.bf16.xpose.msra.mxu0 0
        %1188 = vmatprep.subr.bf16.mxu0 0
        %1189 = vmatpush1.bf16.xpose.msra.mxu0 0
        %1190 = vmatprep.subr.bf16.mxu0 0
        %1191 = vmatpush1.bf16.xpose.msra.mxu0 0
        %1192 = vmatprep.subr.bf16.mxu0 0
        %1193 = vmatpush1.bf16.xpose.msra.mxu0 0
        %1194 = vmatprep.subr.bf16.mxu0 0
        %1195 = vmatpush1.bf16.xpose.msra.mxu0 0
        %1196 = vmatprep.subr.bf16.mxu0 0
        %1197 = vmatpush1.bf16.xpose.msra.mxu0 0
        %1198 = vmatprep.subr.bf16.mxu0 0
        %1199 = vmatpush1.bf16.xpose.msra.mxu0 0
        %1200 = vmatprep.subr.bf16.mxu0 0
        %1201 = vmatpush1.bf16.xpose.msra.mxu0 0
        %1202 = vmatprep.subr.bf16.mxu0 0
        %1203 = vmatpush1.bf16.xpose.msra.mxu0 0
        %1204 = vmatprep.subr.bf16.mxu0 0
        %1205 = vmatpush1.bf16.xpose.msra.mxu0 0
        %1206 = vmatprep.subr.bf16.mxu0 0
        %1207 = vmatpush1.bf16.xpose.msra.mxu0 0
        %1208 = vmatprep.subr.bf16.mxu0 0
        %1209 = vmatpush1.bf16.xpose.msra.mxu0 0
        %1210 = vmatprep.subr.bf16.mxu0 0
        %1211 = vmatpush1.bf16.xpose.msra.mxu0 0
        %1212 = vmatprep.subr.bf16.mxu0 0
        %1213 = vmatpush1.bf16.xpose.msra.mxu0 0
        %1214 = vmatprep.subr.bf16.mxu0 0
        %1215 = vmatpush1.bf16.xpose.msra.mxu0 0
        %1216 = vmatprep.mubr.bf16.mxu0 0
        %1217 = vmatmul.mubr.bf16.gmra.mrb[0].mxu0 %v1179
        %v1218 = vpop.f32.mrb[0].mxu0
        %v1219 = vadd.f32 0.0, %v1218
        %v1220 = vpop.f32.mrb[0].mxu0
        %v1221 = vpop.f32.mrb[0].mxu0
        %v1222 = vpop.f32.mrb[0].mxu0
        %1223 = vdwg.mxu0
        %1225 = vrot.lane.b32.xlu0 %v1124, 96
        %v1226 = vpop.permute.xlu0 %1225
        %v1228 = vsel %vm535, %v1124, 0
        %v1231 = vsel %vm535, %v1226, 0
        %1233 = vmatprep.subr.bf16.mxu0 0
        %1234 = vmatpush1.bf16.xpose.msra.mxu0 %v1231
        %1235 = vmatprep.subr.bf16.mxu0 0
        %1236 = vmatpush1.bf16.xpose.msra.mxu0 0
        %1237 = vmatprep.subr.bf16.mxu0 0
        %1238 = vmatpush1.bf16.xpose.msra.mxu0 0
        %1239 = vmatprep.subr.bf16.mxu0 0
        %1240 = vmatpush1.bf16.xpose.msra.mxu0 0
        %1241 = vmatprep.subr.bf16.mxu0 0
        %1242 = vmatpush1.bf16.xpose.msra.mxu0 0
        %1243 = vmatprep.subr.bf16.mxu0 0
        %1244 = vmatpush1.bf16.xpose.msra.mxu0 0
        %1245 = vmatprep.subr.bf16.mxu0 0
        %1246 = vmatpush1.bf16.xpose.msra.mxu0 0
        %1247 = vmatprep.subr.bf16.mxu0 0
        %1248 = vmatpush1.bf16.xpose.msra.mxu0 0
        %1249 = vmatprep.subr.bf16.mxu0 0
        %1250 = vmatpush1.bf16.xpose.msra.mxu0 0
        %1251 = vmatprep.subr.bf16.mxu0 0
        %1252 = vmatpush1.bf16.xpose.msra.mxu0 0
        %1253 = vmatprep.subr.bf16.mxu0 0
        %1254 = vmatpush1.bf16.xpose.msra.mxu0 0
        %1255 = vmatprep.subr.bf16.mxu0 0
        %1256 = vmatpush1.bf16.xpose.msra.mxu0 0
        %1257 = vmatprep.subr.bf16.mxu0 0
        %1258 = vmatpush1.bf16.xpose.msra.mxu0 0
        %1259 = vmatprep.subr.bf16.mxu0 0
        %1260 = vmatpush1.bf16.xpose.msra.mxu0 0
        %1261 = vmatprep.subr.bf16.mxu0 0
        %1262 = vmatpush1.bf16.xpose.msra.mxu0 0
        %1263 = vmatprep.subr.bf16.mxu0 0
        %1264 = vmatpush1.bf16.xpose.msra.mxu0 0
        %1265 = vmatprep.mubr.bf16.mxu0 0
        %1266 = vmatmul.mubr.bf16.gmra.mrb[0].mxu0 %v1228
        %v1267 = vpop.f32.mrb[0].mxu0
        %v1268 = vadd.f32 0.0, %v1267
        %v1269 = vpop.f32.mrb[0].mxu0
        %v1270 = vpop.f32.mrb[0].mxu0
        %v1271 = vpop.f32.mrb[0].mxu0
        %1272 = vdwg.mxu0
        %1274 = vrot.lane.b32.xlu0 %v1125, 96
        %v1275 = vpop.permute.xlu0 %1274
        %v1277 = vsel %vm535, %v1125, 0
        %v1280 = vsel %vm535, %v1275, 0
        %1282 = vmatprep.subr.bf16.mxu0 0
        %1283 = vmatpush1.bf16.xpose.msra.mxu0 %v1280
        %1284 = vmatprep.subr.bf16.mxu0 0
        %1285 = vmatpush1.bf16.xpose.msra.mxu0 0
        %1286 = vmatprep.subr.bf16.mxu0 0
        %1287 = vmatpush1.bf16.xpose.msra.mxu0 0
        %1288 = vmatprep.subr.bf16.mxu0 0
        %1289 = vmatpush1.bf16.xpose.msra.mxu0 0
        %1290 = vmatprep.subr.bf16.mxu0 0
        %1291 = vmatpush1.bf16.xpose.msra.mxu0 0
        %1292 = vmatprep.subr.bf16.mxu0 0
        %1293 = vmatpush1.bf16.xpose.msra.mxu0 0
        %1294 = vmatprep.subr.bf16.mxu0 0
        %1295 = vmatpush1.bf16.xpose.msra.mxu0 0
        %1296 = vmatprep.subr.bf16.mxu0 0
        %1297 = vmatpush1.bf16.xpose.msra.mxu0 0
        %1298 = vmatprep.subr.bf16.mxu0 0
        %1299 = vmatpush1.bf16.xpose.msra.mxu0 0
        %1300 = vmatprep.subr.bf16.mxu0 0
        %1301 = vmatpush1.bf16.xpose.msra.mxu0 0
        %1302 = vmatprep.subr.bf16.mxu0 0
        %1303 = vmatpush1.bf16.xpose.msra.mxu0 0
        %1304 = vmatprep.subr.bf16.mxu0 0
        %1305 = vmatpush1.bf16.xpose.msra.mxu0 0
        %1306 = vmatprep.subr.bf16.mxu0 0
        %1307 = vmatpush1.bf16.xpose.msra.mxu0 0
        %1308 = vmatprep.subr.bf16.mxu0 0
        %1309 = vmatpush1.bf16.xpose.msra.mxu0 0
        %1310 = vmatprep.subr.bf16.mxu0 0
        %1311 = vmatpush1.bf16.xpose.msra.mxu0 0
        %1312 = vmatprep.subr.bf16.mxu0 0
        %1313 = vmatpush1.bf16.xpose.msra.mxu0 0
        %1314 = vmatprep.mubr.bf16.mxu0 0
        %1315 = vmatmul.mubr.bf16.gmra.mrb[0].mxu0 %v1277
        %v1316 = vpop.f32.mrb[0].mxu0
        %v1317 = vadd.f32 0.0, %v1316
        %v1318 = vpop.f32.mrb[0].mxu0
        %v1319 = vpop.f32.mrb[0].mxu0
        %v1320 = vpop.f32.mrb[0].mxu0
        %1321 = vdwg.mxu0
        %v1322 = vsel %vm535, %v1170, -inf
        %1323 = vmax.xlane.f32.xlu0 %v1322
        %v1324 = vpop.xlane.xlu0 %1323
        %v1325 = vsel %vm535, %v1219, -inf
        %1326 = vmax.xlane.f32.xlu0 %v1325
        %v1327 = vpop.xlane.xlu0 %1326
        %v1328 = vsel %vm535, %v1268, -inf
        %1329 = vmax.xlane.f32.xlu0 %v1328
        %v1330 = vpop.xlane.xlu0 %1329
        %v1331 = vsel %vm535, %v1317, -inf
        %1332 = vmax.xlane.f32.xlu0 %v1331
        %v1333 = vpop.xlane.xlu0 %1332
        %v1334 = vsub.f32 %v1170, %v1324
        %v1335 = vsub.f32 %v1219, %v1327
        %v1336 = vsub.f32 %v1268, %v1330
        %v1337 = vsub.f32 %v1317, %v1333
        %v1338 = vmul.f32 %v1334, 1.442695
        %v1339 = vpow.pop %v1338
        %v1340 = vmul.f32 %v1335, 1.442695
        %v1341 = vpow.pop %v1340
        %v1342 = vmul.f32 %v1336, 1.442695
        %v1343 = vpow.pop %v1342
        %v1344 = vmul.f32 %v1337, 1.442695
        %v1345 = vpow.pop %v1344
        %v1346 = vsel %vm535, %v1339, 0.0
        %1347 = vadd.xlane.f32.xlu0 %v1346
        %v1348 = vpop.xlane.xlu0 %1347
        %v1349 = vsel %vm535, %v1341, 0.0
        %1350 = vadd.xlane.f32.xlu0 %v1349
        %v1351 = vpop.xlane.xlu0 %1350
        %v1352 = vsel %vm535, %v1343, 0.0
        %1353 = vadd.xlane.f32.xlu0 %v1352
        %v1354 = vpop.xlane.xlu0 %1353
        %v1355 = vsel %vm535, %v1345, 0.0
        %1356 = vadd.xlane.f32.xlu0 %v1355
        %v1357 = vpop.xlane.xlu0 %1356
        %v1358 = vrcp.pop %v1348
        %v1359 = vrcp.pop %v1351
        %v1360 = vrcp.pop %v1354
        %v1361 = vrcp.pop %v1357
        %v1362 = vmul.f32 %v1339, %v1358
        %v1363 = vmul.f32 %v1341, %v1359
        %v1364 = vmul.f32 %v1343, %v1360
        %v1365 = vmul.f32 %v1345, %v1361
        %v1366 = vpack.c.bf16 %v1362, %v1362
        %v1367 = vpack.c.bf16 %v1363, %v1363
        %v1368 = vpack.c.bf16 %v1364, %v1364
        %v1369 = vpack.c.bf16 %v1365, %v1365
        %1370 = vrot.lane.b32.xlu0 %v1122, 64
        %v1371 = vpop.permute.xlu0 %1370
        %v1373 = vsel %vm535, %v1366, 0
        %vm1375 = vcmask 1043456
        %v1377 = vsel %vm1375, %v1371, 0
        %1379 = vmatprep.subr.bf16.mxu0 0
        %1380 = vmatpush1.bf16.msra.mxu0 %v1377
        %1381 = vmatprep.subr.bf16.mxu0 0
        %1382 = vmatpush1.bf16.msra.mxu0 0
        %1383 = vmatprep.subr.bf16.mxu0 0
        %1384 = vmatpush1.bf16.msra.mxu0 0
        %1385 = vmatprep.subr.bf16.mxu0 0
        %1386 = vmatpush1.bf16.msra.mxu0 0
        %1387 = vmatprep.subr.bf16.mxu0 0
        %1388 = vmatpush1.bf16.msra.mxu0 0
        %1389 = vmatprep.subr.bf16.mxu0 0
        %1390 = vmatpush1.bf16.msra.mxu0 0
        %1391 = vmatprep.subr.bf16.mxu0 0
        %1392 = vmatpush1.bf16.msra.mxu0 0
        %1393 = vmatprep.subr.bf16.mxu0 0
        %1394 = vmatpush1.bf16.msra.mxu0 0
        %1395 = vmatprep.subr.bf16.mxu0 0
        %1396 = vmatpush1.bf16.msra.mxu0 0
        %1397 = vmatprep.subr.bf16.mxu0 0
        %1398 = vmatpush1.bf16.msra.mxu0 0
        %1399 = vmatprep.subr.bf16.mxu0 0
        %1400 = vmatpush1.bf16.msra.mxu0 0
        %1401 = vmatprep.subr.bf16.mxu0 0
        %1402 = vmatpush1.bf16.msra.mxu0 0
        %1403 = vmatprep.subr.bf16.mxu0 0
        %1404 = vmatpush1.bf16.msra.mxu0 0
        %1405 = vmatprep.subr.bf16.mxu0 0
        %1406 = vmatpush1.bf16.msra.mxu0 0
        %1407 = vmatprep.subr.bf16.mxu0 0
        %1408 = vmatpush1.bf16.msra.mxu0 0
        %1409 = vmatprep.subr.bf16.mxu0 0
        %1410 = vmatpush1.bf16.msra.mxu0 0
        %1411 = vmatprep.mubr.bf16.mxu0 0
        %1412 = vmatmul.mubr.bf16.gmra.mrb[0].mxu0 %v1373
        %v1413 = vpop.f32.mrb[0].mxu0
        %v1414 = vadd.f32 0.0, %v1413
        %v1415 = vpop.f32.mrb[0].mxu0
        %v1416 = vpop.f32.mrb[0].mxu0
        %v1417 = vpop.f32.mrb[0].mxu0
        %1418 = vdwg.mxu0
        %1419 = vrot.lane.b32.xlu0 %v1123, 64
        %v1420 = vpop.permute.xlu0 %1419
        %v1422 = vsel %vm535, %v1367, 0
        %v1425 = vsel %vm1375, %v1420, 0
        %1427 = vmatprep.subr.bf16.mxu0 0
        %1428 = vmatpush1.bf16.msra.mxu0 %v1425
        %1429 = vmatprep.subr.bf16.mxu0 0
        %1430 = vmatpush1.bf16.msra.mxu0 0
        %1431 = vmatprep.subr.bf16.mxu0 0
        %1432 = vmatpush1.bf16.msra.mxu0 0
        %1433 = vmatprep.subr.bf16.mxu0 0
        %1434 = vmatpush1.bf16.msra.mxu0 0
        %1435 = vmatprep.subr.bf16.mxu0 0
        %1436 = vmatpush1.bf16.msra.mxu0 0
        %1437 = vmatprep.subr.bf16.mxu0 0
        %1438 = vmatpush1.bf16.msra.mxu0 0
        %1439 = vmatprep.subr.bf16.mxu0 0
        %1440 = vmatpush1.bf16.msra.mxu0 0
        %1441 = vmatprep.subr.bf16.mxu0 0
        %1442 = vmatpush1.bf16.msra.mxu0 0
        %1443 = vmatprep.subr.bf16.mxu0 0
        %1444 = vmatpush1.bf16.msra.mxu0 0
        %1445 = vmatprep.subr.bf16.mxu0 0
        %1446 = vmatpush1.bf16.msra.mxu0 0
        %1447 = vmatprep.subr.bf16.mxu0 0
        %1448 = vmatpush1.bf16.msra.mxu0 0
        %1449 = vmatprep.subr.bf16.mxu0 0
        %1450 = vmatpush1.bf16.msra.mxu0 0
        %1451 = vmatprep.subr.bf16.mxu0 0
        %1452 = vmatpush1.bf16.msra.mxu0 0
        %1453 = vmatprep.subr.bf16.mxu0 0
        %1454 = vmatpush1.bf16.msra.mxu0 0
        %1455 = vmatprep.subr.bf16.mxu0 0
        %1456 = vmatpush1.bf16.msra.mxu0 0
        %1457 = vmatprep.subr.bf16.mxu0 0
        %1458 = vmatpush1.bf16.msra.mxu0 0
        %1459 = vmatprep.mubr.bf16.mxu0 0
        %1460 = vmatmul.mubr.bf16.gmra.mrb[0].mxu0 %v1422
        %v1461 = vpop.f32.mrb[0].mxu0
        %v1462 = vadd.f32 0.0, %v1461
        %v1463 = vpop.f32.mrb[0].mxu0
        %v1464 = vpop.f32.mrb[0].mxu0
        %v1465 = vpop.f32.mrb[0].mxu0
        %1466 = vdwg.mxu0
        %1467 = vrot.lane.b32.xlu0 %v1124, 64
        %v1468 = vpop.permute.xlu0 %1467
        %v1470 = vsel %vm535, %v1368, 0
        %v1473 = vsel %vm1375, %v1468, 0
        %1475 = vmatprep.subr.bf16.mxu0 0
        %1476 = vmatpush1.bf16.msra.mxu0 %v1473
        %1477 = vmatprep.subr.bf16.mxu0 0
        %1478 = vmatpush1.bf16.msra.mxu0 0
        %1479 = vmatprep.subr.bf16.mxu0 0
        %1480 = vmatpush1.bf16.msra.mxu0 0
        %1481 = vmatprep.subr.bf16.mxu0 0
        %1482 = vmatpush1.bf16.msra.mxu0 0
        %1483 = vmatprep.subr.bf16.mxu0 0
        %1484 = vmatpush1.bf16.msra.mxu0 0
        %1485 = vmatprep.subr.bf16.mxu0 0
        %1486 = vmatpush1.bf16.msra.mxu0 0
        %1487 = vmatprep.subr.bf16.mxu0 0
        %1488 = vmatpush1.bf16.msra.mxu0 0
        %1489 = vmatprep.subr.bf16.mxu0 0
        %1490 = vmatpush1.bf16.msra.mxu0 0
        %1491 = vmatprep.subr.bf16.mxu0 0
        %1492 = vmatpush1.bf16.msra.mxu0 0
        %1493 = vmatprep.subr.bf16.mxu0 0
        %1494 = vmatpush1.bf16.msra.mxu0 0
        %1495 = vmatprep.subr.bf16.mxu0 0
        %1496 = vmatpush1.bf16.msra.mxu0 0
        %1497 = vmatprep.subr.bf16.mxu0 0
        %1498 = vmatpush1.bf16.msra.mxu0 0
        %1499 = vmatprep.subr.bf16.mxu0 0
        %1500 = vmatpush1.bf16.msra.mxu0 0
        %1501 = vmatprep.subr.bf16.mxu0 0
        %1502 = vmatpush1.bf16.msra.mxu0 0
        %1503 = vmatprep.subr.bf16.mxu0 0
        %1504 = vmatpush1.bf16.msra.mxu0 0
        %1505 = vmatprep.subr.bf16.mxu0 0
        %1506 = vmatpush1.bf16.msra.mxu0 0
        %1507 = vmatprep.mubr.bf16.mxu0 0
        %1508 = vmatmul.mubr.bf16.gmra.mrb[0].mxu0 %v1470
        %v1509 = vpop.f32.mrb[0].mxu0
        %v1510 = vadd.f32 0.0, %v1509
        %v1511 = vpop.f32.mrb[0].mxu0
        %v1512 = vpop.f32.mrb[0].mxu0
        %v1513 = vpop.f32.mrb[0].mxu0
        %1514 = vdwg.mxu0
        %1515 = vrot.lane.b32.xlu0 %v1125, 64
        %v1516 = vpop.permute.xlu0 %1515
        %v1518 = vsel %vm535, %v1369, 0
        %v1521 = vsel %vm1375, %v1516, 0
        %1523 = vmatprep.subr.bf16.mxu0 0
        %1524 = vmatpush1.bf16.msra.mxu0 %v1521
        %1525 = vmatprep.subr.bf16.mxu0 0
        %1526 = vmatpush1.bf16.msra.mxu0 0
        %1527 = vmatprep.subr.bf16.mxu0 0
        %1528 = vmatpush1.bf16.msra.mxu0 0
        %1529 = vmatprep.subr.bf16.mxu0 0
        %1530 = vmatpush1.bf16.msra.mxu0 0
        %1531 = vmatprep.subr.bf16.mxu0 0
        %1532 = vmatpush1.bf16.msra.mxu0 0
        %1533 = vmatprep.subr.bf16.mxu0 0
        %1534 = vmatpush1.bf16.msra.mxu0 0
        %1535 = vmatprep.subr.bf16.mxu0 0
        %1536 = vmatpush1.bf16.msra.mxu0 0
        %1537 = vmatprep.subr.bf16.mxu0 0
        %1538 = vmatpush1.bf16.msra.mxu0 0
        %1539 = vmatprep.subr.bf16.mxu0 0
        %1540 = vmatpush1.bf16.msra.mxu0 0
        %1541 = vmatprep.subr.bf16.mxu0 0
        %1542 = vmatpush1.bf16.msra.mxu0 0
        %1543 = vmatprep.subr.bf16.mxu0 0
        %1544 = vmatpush1.bf16.msra.mxu0 0
        %1545 = vmatprep.subr.bf16.mxu0 0
        %1546 = vmatpush1.bf16.msra.mxu0 0
        %1547 = vmatprep.subr.bf16.mxu0 0
        %1548 = vmatpush1.bf16.msra.mxu0 0
        %1549 = vmatprep.subr.bf16.mxu0 0
        %1550 = vmatpush1.bf16.msra.mxu0 0
        %1551 = vmatprep.subr.bf16.mxu0 0
        %1552 = vmatpush1.bf16.msra.mxu0 0
        %1553 = vmatprep.subr.bf16.mxu0 0
        %1554 = vmatpush1.bf16.msra.mxu0 0
        %1555 = vmatprep.mubr.bf16.mxu0 0
        %1556 = vmatmul.mubr.bf16.gmra.mrb[0].mxu0 %v1518
        %v1557 = vpop.f32.mrb[0].mxu0
        %v1558 = vadd.f32 0.0, %v1557
        %v1559 = vpop.f32.mrb[0].mxu0
        %v1560 = vpop.f32.mrb[0].mxu0
        %v1561 = vpop.f32.mrb[0].mxu0
        %1562 = vdwg.mxu0
        %1564 = vrot.lane.b32.xlu0 %v1462, 8
        %v1565 = vpop.permute.xlu0 %1564
        %1568 = vrot.lane.b32.xlu0 %v1510, 16
        %v1569 = vpop.permute.xlu0 %1568
        %1572 = vrot.lane.b32.xlu0 %v1558, 24
        %v1573 = vpop.permute.xlu0 %1572
        %v1575 = vsel %vm535, %v1414, %v1565
        %v1576 = vsel %vm720, %v1575, %v1569
        %v1577 = vsel %vm971, %v1576, %v1573
        %v1578 = vld [vmem:[%s362] sm:$0xff]
        %v1579 = vld [vmem:[%s362 + $0x8] sm:$0xff]
        %v1580 = vld [vmem:[%s362 + $0x10] sm:$0xff]
        %v1581 = vld [vmem:[%s362 + $0x18] sm:$0xff]
        %v1582 = vpack.c.bf16 %v1577, %v1577
        %v1583 = vpack.c.bf16 %v1579, %v1578
        %v1584 = vpack.c.bf16 %v1581, %v1580
        %v1585 = vld [vmem:[%s371 + $0x1] sm:$0x1]
        %v1587 = vlaneseq
        %v1588 = vshrl.u32 %v1587, 7
        %v1589 = vsub.s32 0, %v1588
        %v1590 = vrot.slane %v1585, %v1589
        %1593 = vrot.lane.b32.xlu0 %v1583, 96
        %v1594 = vpop.permute.xlu0 %1593
        %1595 = vrot.lane.b32.xlu0 %v1584, 96
        %v1596 = vpop.permute.xlu0 %1595
        %1599 = vrot.lane.b32.xlu0 %v1590, 32
        %v1600 = vpop.permute.xlu0 %1599
        %v1603 = vsel %vm397, %v1582, 0
        %1605 = vmatprep.subr.bf16.mxu0 0
        %1606 = vmatpush1.bf16.msra.mxu0 %v1594
        %1607 = vmatprep.subr.bf16.mxu0 0
        %1608 = vmatpush1.bf16.msra.mxu0 %v1596
        %1609 = vmatprep.subr.bf16.mxu0 0
        %1610 = vmatpush1.bf16.msra.mxu0 0
        %1611 = vmatprep.subr.bf16.mxu0 0
        %1612 = vmatpush1.bf16.msra.mxu0 0
        %1613 = vmatprep.subr.bf16.mxu0 0
        %1614 = vmatpush1.bf16.msra.mxu0 0
        %1615 = vmatprep.subr.bf16.mxu0 0
        %1616 = vmatpush1.bf16.msra.mxu0 0
        %1617 = vmatprep.subr.bf16.mxu0 0
        %1618 = vmatpush1.bf16.msra.mxu0 0
        %1619 = vmatprep.subr.bf16.mxu0 0
        %1620 = vmatpush1.bf16.msra.mxu0 0
        %1621 = vmatprep.subr.bf16.mxu0 0
        %1622 = vmatpush1.bf16.msra.mxu0 0
        %1623 = vmatprep.subr.bf16.mxu0 0
        %1624 = vmatpush1.bf16.msra.mxu0 0
        %1625 = vmatprep.subr.bf16.mxu0 0
        %1626 = vmatpush1.bf16.msra.mxu0 0
        %1627 = vmatprep.subr.bf16.mxu0 0
        %1628 = vmatpush1.bf16.msra.mxu0 0
        %1629 = vmatprep.subr.bf16.mxu0 0
        %1630 = vmatpush1.bf16.msra.mxu0 0
        %1631 = vmatprep.subr.bf16.mxu0 0
        %1632 = vmatpush1.bf16.msra.mxu0 0
        %1633 = vmatprep.subr.bf16.mxu0 0
        %1634 = vmatpush1.bf16.msra.mxu0 0
        %1635 = vmatprep.subr.bf16.mxu0 0
        %1636 = vmatpush1.bf16.msra.mxu0 0
        %1637 = vmatprep.mubr.bf16.mxu0 0
        %1638 = vmatmul.mubr.bf16.gmra.mrb[0].mxu0 %v1603
        %v1639 = vpop.f32.mrb[0].mxu0
        %v1640 = vadd.f32 %v1600, %v1639
        %v1641 = vpop.f32.mrb[0].mxu0
        %v1642 = vpop.f32.mrb[0].mxu0
        %v1643 = vpop.f32.mrb[0].mxu0
        %1644 = vdwg.mxu0
        %v1645 = vadd.f32 %v1027, %v1640
        %v1646 = vld [vmem:[%s371 + $0x2] sm:$0x1]
        %v1647 = vld [vmem:[%s371 + $0x3] sm:$0x1]
        %v1648 = vsel %vm397, %v1645, 0.0
        %1649 = vadd.xlane.f32.xlu0 %v1648
        %v1650 = vpop.xlane.xlu0 %1649
        %v1651 = vrcp.pop 32.0
        %v1652 = vmul.f32 %v1650, %v1651
        %v1653 = vmul.f32 %v1645, %v1645
        %v1654 = vsel %vm397, %v1653, 0.0
        %1655 = vadd.xlane.f32.xlu0 %v1654
        %v1656 = vpop.xlane.xlu0 %1655
        %v1657 = vmul.f32 %v1656, %v1651
        %v1658 = vsub.f32 %v1645, %v1652
        %v1659 = vmul.f32 %v1652, %v1652
        %v1660 = vsub.f32 %v1657, %v1659
        %v1661 = vadd.f32 %v1660, 1e-05
        %v1662 = vrsqrt.pop %v1661
        %v1663 = vmul.f32 %v1658, %v1662
        %v1665 = vlaneseq
        %v1666 = vshrl.u32 %v1665, 7
        %v1667 = vsub.s32 0, %v1666
        %v1668 = vrot.slane %v1646, %v1667
        %1669 = vrot.lane.b32.xlu0 %v1668, 32
        %v1670 = vpop.permute.xlu0 %1669
        %v1672 = vmul.f32 %v1663, %v1670
        %v1674 = vlaneseq
        %v1675 = vshrl.u32 %v1674, 7
        %v1676 = vsub.s32 0, %v1675
        %v1677 = vrot.slane %v1647, %v1676
        %v1679 = vadd.f32 %v1672, %v1677
        %v1680 = vld [vmem:[%s357 + $0x8] sm:$0xff]
        %v1681 = vld [vmem:[%s357 + $0x18] sm:$0xff]
        %v1682 = vld [vmem:[%s357 + $0x28] sm:$0xff]
        %v1683 = vld [vmem:[%s357 + $0x38] sm:$0xff]
        %v1684 = vpack.c.bf16 %v1679, %v1679
        %v1685 = vpack.c.bf16 %v1681, %v1680
        %v1686 = vpack.c.bf16 %v1683, %v1682
        %1690 = vrot.lane.b32.xlu0 %v1685, 64
        %v1691 = vpop.permute.xlu0 %1690
        %1692 = vrot.lane.b32.xlu0 %v1686, 64
        %v1693 = vpop.permute.xlu0 %1692
        %v1697 = vsel %vm397, %v1684, 0
        %1699 = vmatprep.subr.bf16.mxu0 0
        %1700 = vmatpush1.bf16.msra.mxu0 %v1691
        %1701 = vmatprep.subr.bf16.mxu0 0
        %1702 = vmatpush1.bf16.msra.mxu0 %v1693
        %1703 = vmatprep.subr.bf16.mxu0 0
        %1704 = vmatpush1.bf16.msra.mxu0 0
        %1705 = vmatprep.subr.bf16.mxu0 0
        %1706 = vmatpush1.bf16.msra.mxu0 0
        %1707 = vmatprep.subr.bf16.mxu0 0
        %1708 = vmatpush1.bf16.msra.mxu0 0
        %1709 = vmatprep.subr.bf16.mxu0 0
        %1710 = vmatpush1.bf16.msra.mxu0 0
        %1711 = vmatprep.subr.bf16.mxu0 0
        %1712 = vmatpush1.bf16.msra.mxu0 0
        %1713 = vmatprep.subr.bf16.mxu0 0
        %1714 = vmatpush1.bf16.msra.mxu0 0
        %1715 = vmatprep.subr.bf16.mxu0 0
        %1716 = vmatpush1.bf16.msra.mxu0 0
        %1717 = vmatprep.subr.bf16.mxu0 0
        %1718 = vmatpush1.bf16.msra.mxu0 0
        %1719 = vmatprep.subr.bf16.mxu0 0
        %1720 = vmatpush1.bf16.msra.mxu0 0
        %1721 = vmatprep.subr.bf16.mxu0 0
        %1722 = vmatpush1.bf16.msra.mxu0 0
        %1723 = vmatprep.subr.bf16.mxu0 0
        %1724 = vmatpush1.bf16.msra.mxu0 0
        %1725 = vmatprep.subr.bf16.mxu0 0
        %1726 = vmatpush1.bf16.msra.mxu0 0
        %1727 = vmatprep.subr.bf16.mxu0 0
        %1728 = vmatpush1.bf16.msra.mxu0 0
        %1729 = vmatprep.subr.bf16.mxu0 0
        %1730 = vmatpush1.bf16.msra.mxu0 0
        %1731 = vmatprep.mubr.bf16.mxu0 0
        %1732 = vmatmul.mubr.bf16.gmra.mrb[0].mxu0 %v1697
        %v1733 = vpop.f32.mrb[0].mxu0
        %v1734 = vadd.f32 %v1668, %v1733
        %v1735 = vpop.f32.mrb[0].mxu0
        %v1736 = vpop.f32.mrb[0].mxu0
        %v1737 = vpop.f32.mrb[0].mxu0
        %1738 = vdwg.mxu0
        %v1739 = vmax.f32 %v1734, 0.0
        %v1740 = vld [vmem:[%s367] sm:$0xff]
        %v1741 = vld [vmem:[%s367 + $0x8] sm:$0xff]
        %v1742 = vld [vmem:[%s367 + $0x10] sm:$0xff]
        %v1743 = vld [vmem:[%s367 + $0x18] sm:$0xff]
        %v1744 = vld [vmem:[%s367 + $0x20] sm:$0xff]
        %v1745 = vld [vmem:[%s367 + $0x28] sm:$0xff]
        %v1746 = vld [vmem:[%s367 + $0x30] sm:$0xff]
        %v1747 = vld [vmem:[%s367 + $0x38] sm:$0xff]
        %v1748 = vpack.c.bf16 %v1739, %v1739
        %v1749 = vpack.c.bf16 %v1741, %v1740
        %v1750 = vpack.c.bf16 %v1743, %v1742
        %v1751 = vpack.c.bf16 %v1745, %v1744
        %v1752 = vpack.c.bf16 %v1747, %v1746
        %1753 = vrot.lane.b32.xlu0 %v1668, 64
        %v1754 = vpop.permute.xlu0 %1753
        %vm1756 = vcmask 523264
        %v1758 = vsel %vm1756, %v1748, 0
        %1760 = vmatprep.subr.bf16.mxu0 0
        %1761 = vmatpush1.bf16.msra.mxu0 %v1749
        %1762 = vmatprep.subr.bf16.mxu0 0
        %1763 = vmatpush1.bf16.msra.mxu0 %v1750
        %1764 = vmatprep.subr.bf16.mxu0 0
        %1765 = vmatpush1.bf16.msra.mxu0 %v1751
        %1766 = vmatprep.subr.bf16.mxu0 0
        %1767 = vmatpush1.bf16.msra.mxu0 %v1752
        %1768 = vmatprep.subr.bf16.mxu0 0
        %1769 = vmatpush1.bf16.msra.mxu0 0
        %1770 = vmatprep.subr.bf16.mxu0 0
        %1771 = vmatpush1.bf16.msra.mxu0 0
        %1772 = vmatprep.subr.bf16.mxu0 0
        %1773 = vmatpush1.bf16.msra.mxu0 0
        %1774 = vmatprep.subr.bf16.mxu0 0
        %1775 = vmatpush1.bf16.msra.mxu0 0
        %1776 = vmatprep.subr.bf16.mxu0 0
        %1777 = vmatpush1.bf16.msra.mxu0 0
        %1778 = vmatprep.subr.bf16.mxu0 0
        %1779 = vmatpush1.bf16.msra.mxu0 0
        %1780 = vmatprep.subr.bf16.mxu0 0
        %1781 = vmatpush1.bf16.msra.mxu0 0
        %1782 = vmatprep.subr.bf16.mxu0 0
        %1783 = vmatpush1.bf16.msra.mxu0 0
        %1784 = vmatprep.subr.bf16.mxu0 0
        %1785 = vmatpush1.bf16.msra.mxu0 0
        %1786 = vmatprep.subr.bf16.mxu0 0
        %1787 = vmatpush1.bf16.msra.mxu0 0
        %1788 = vmatprep.subr.bf16.mxu0 0
        %1789 = vmatpush1.bf16.msra.mxu0 0
        %1790 = vmatprep.subr.bf16.mxu0 0
        %1791 = vmatpush1.bf16.msra.mxu0 0
        %1792 = vmatprep.mubr.bf16.mxu0 0
        %1793 = vmatmul.mubr.bf16.gmra.mrb[0].mxu0 %v1758
        %v1794 = vpop.f32.mrb[0].mxu0
        %v1795 = vadd.f32 %v1754, %v1794
        %v1796 = vpop.f32.mrb[0].mxu0
        %v1797 = vpop.f32.mrb[0].mxu0
        %v1798 = vpop.f32.mrb[0].mxu0
        %1799 = vdwg.mxu0
        %v1800 = vadd.f32 %v1679, %v1795
        %v1801 = vsel %vm397, %v1800, 0.0
        %1802 = vadd.xlane.f32.xlu0 %v1801
        %v1803 = vpop.xlane.xlu0 %1802
        %v1804 = vmul.f32 %v1803, %v1651
        %v1805 = vmul.f32 %v1800, %v1800
        %v1806 = vsel %vm397, %v1805, 0.0
        %1807 = vadd.xlane.f32.xlu0 %v1806
        %v1808 = vpop.xlane.xlu0 %1807
        %v1809 = vmul.f32 %v1808, %v1651
        %v1810 = vsub.f32 %v1800, %v1804
        %v1811 = vmul.f32 %v1804, %v1804
        %v1812 = vsub.f32 %v1809, %v1811
        %v1813 = vadd.f32 %v1812, 1e-05
        %v1814 = vrsqrt.pop %v1813
        %v1815 = vmul.f32 %v1810, %v1814
        %1816 = vrot.lane.b32.xlu0 %v1677, 96
        %v1817 = vpop.permute.xlu0 %1816
        %v1819 = vmul.f32 %v1815, %v1817
        %1820 = vrot.lane.b32.xlu0 %v1677, 64
        %v1821 = vpop.permute.xlu0 %1820
        %v1823 = vadd.f32 %v1819, %v1821
        %1824 = vst.msk [vmem:[#allocation2] sm:$0xff] %vm397, %v1823
        %p1825 = scmp.eq.s32.totalorder %s29, 1
        // Predicated region
        $region57: #{tpu_custom_call.1} parent=43 // pred_check
          %p1826 = pneg %p1825
        $region58: #{tpu_custom_call.1} parent=43 // pred_check_branch
          %1828 = sbr.rel (%p1826) target = $region60
        $region59: #{tpu_custom_call.1} parent=43 // pred_region
          %v1830 = vrot.slane %v1823, 1
          %1831 = vrot.lane.b32.xlu0 %v1830, 32
          %v1832 = vpop.permute.xlu0 %1831
          %v1834 = vrot.slane %v1823, 2
          %1835 = vrot.lane.b32.xlu0 %v1834, 64
          %v1836 = vpop.permute.xlu0 %1835
          %v1838 = vrot.slane %v1823, 3
          %1839 = vrot.lane.b32.xlu0 %v1838, 96
          %v1840 = vpop.permute.xlu0 %1839
          %v1842 = vrot.slane %v1823, 4
          %v1844 = vrot.slane %v1823, 5
          %1845 = vrot.lane.b32.xlu0 %v1844, 32
          %v1846 = vpop.permute.xlu0 %1845
          %v1848 = vrot.slane %v1823, 6
          %1849 = vrot.lane.b32.xlu0 %v1848, 64
          %v1850 = vpop.permute.xlu0 %1849
          %v1852 = vrot.slane %v1823, 7
          %1853 = vrot.lane.b32.xlu0 %v1852, 96
          %v1854 = vpop.permute.xlu0 %1853
          %v1856 = vsel %vm397, %v1823, %v1832
          %v1857 = vsel %vm1756, %v1856, %v1836
          %vm1858 = vcmask 785408
          %v1859 = vsel %vm1858, %v1857, %v1840
          %v1860 = vsel %vm397, %v1842, %v1846
          %v1861 = vsel %vm1756, %v1860, %v1850
          %v1862 = vsel %vm1858, %v1861, %v1854
          %v1865 = vcombine.low %v1859, %v1862
          %v1867 = vunpack.c.l.s4 1966171168
          %v1868 = vunpack.c.0.s8 %v1867
          %v1869 = vlaneseq
          %v1870 = vshrl.u32 %v1869, 7
          %v1871 = vsub.s32 %v1868, %v1870
          %v1872 = vrot.slane %v1865, %v1871
          %v1874 = vunpack.c.l.s4 1966171168
          %v1875 = vunpack.c.0.s8 %v1874
          %v1876 = vlaneseq
          %v1877 = vshrl.u32 %v1876, 7
          %v1878 = vsub.s32 %v1875, %v1877
          %v1879 = vrot.slane %v1872, %v1878
          %v1881 = vlaneseq
          %vm1882 = vcmp.ge.s32.totalorder %v1881, 0
          %vm1883 = vcmp.lt.s32.totalorder %v1881, 256
          %vm1884 = vmand %vm1882, %vm1883
          %1885 = vst.msk [vmem:[%s352] sm:$0x3] %vm1884, %v1879
        $region60: #{tpu_custom_call.1} parent=43 // pred_fallthru
          _
        %s1886 = sand.u32 %s195, 1
        %s1887 = scalar_lea.sflag [#allocation5], %s1886
        %s1888 = sand.u32 %s195, 1
        %s1889 = smul.addr %s1888, 2
        %s1890 = scalar_lea.vmem [#allocation8], %s1889
        // Predicated region
        $region61: #{tpu_custom_call.1} parent=43 // pred_check
          %p1891 = pneg %p205
        $region62: #{tpu_custom_call.1} parent=43 // pred_check_branch
          %1893 = sbr.rel (%p1891) target = $region64
        $region63: #{tpu_custom_call.1} parent=43 // pred_region
          %s1895 = ssub.s32 32, 32
          %1896 = vsyncadd %s1887, %s1895
          %s1897 = smul.addr %s28, 2
          %s1898 = smul.addr %s1897, 16
          %s1899 = scalar_lea.hbm %s6, %s1898
          %s1901 = sshll.u32 %s1890, 4
          %s1902 = int_to_ptr.vmem [resolvable:$true] %s1901
          %1904 = dma.vmem_to_hbm [thread:$0]  %s1902, 32, %s1899, %s1887
        $region64: #{tpu_custom_call.1} parent=43 // pred_fallthru
          _
      $region44: #{tpu_custom_call.1} parent=5 // pred_fallthru
        _
      %p1905 = scmp.le.s32.totalorder 2, %s19
      // Predicated region
      $region65: #{tpu_custom_call.1} parent=5 // pred_check
        %p1906 = pneg %p1905
      $region66: #{tpu_custom_call.1} parent=5 // pred_check_branch
        %1908 = sbr.rel (%p1906) target = $region68
      $region67: #{tpu_custom_call.1} parent=5 // pred_region
        %s1909 = ssub.s32 %s19, 2
        // Predicated region
        $region69: #{tpu_custom_call.1} parent=67 // pred_check
          %p1910 = pneg %p211
        $region70: #{tpu_custom_call.1} parent=67 // pred_check_branch
          %1912 = sbr.rel (%p1910) target = $region72
        $region71: #{tpu_custom_call.1} parent=67 // pred_region
          %s1913 = sand.u32 %s196, 1
          %s1914 = scalar_lea.sflag [#allocation5], %s1913
          %s1915 = sand.u32 %s196, 1
          %s1916 = smul.addr %s1915, 2
          %s1917 = scalar_lea.vmem [#allocation8], %s1916
          %1918 = dma.done %s1914, 32
        $region72: #{tpu_custom_call.1} parent=67 // pred_fallthru
          _
      $region68: #{tpu_custom_call.1} parent=5 // pred_fallthru
        _
    $region6: #{tpu_custom_call.1} parent=1 // loop_footer
      %s23 = sadd.s32 1, %s19
    $region7: #{tpu_custom_call.1} parent=1 // loop_footer_branch
      %18 = sbr.rel target = $region3
    $region8: #{tpu_custom_call.1} parent=1 // loop_exit
      _
    %1919 = vsyncpa [#allocation4], 1
    %s1920 = scalar_lea.sflag [#allocation4], 1
    %1921 = vsyncpa %s1920, 1
    %1922 = vsyncpa [#allocation7], 1
    %1923 = vsyncpa [#allocation5], 1
    %s1924 = scalar_lea.sflag [#allocation5], 1
    %1925 = vsyncpa %s1924, 1

</llo_original>
